<compile_context>
chip_gen: v7x
topology: tpu7x:2x2x1
jax: 0.10.0
libtpu: 0.0.40
codegen_flags: <defaults>
</compile_context>

<pallas_src>
import jax
import jax.numpy as jnp
from jax.experimental import pallas as pl
from jax.experimental.pallas import tpu as pltpu


def _single_layer_kernel(x_ref, scale_ref, shift_ref, w_ref, out_ref, pad_ref):
    # x_ref:     (1, H, W, C)    NHWC tile (one image per grid step)
    # scale_ref: (1, C)          fused BN scale  = gamma * rsqrt(var + eps)
    # shift_ref: (1, C)          fused BN shift  = beta - mean * scale
    # w_ref:     (9*C, G)        conv weights, taps flattened (ky,kx,C) row-major -> G
    # out_ref:   (1, H, W, G)    conv(relu(bn(x)))
    # pad_ref:   (H+2, W+2, C)   VMEM scratch for the zero-padded activation (per-tile)
    _, H, W, C = x_ref.shape
    G = w_ref.shape[-1]

    x = x_ref[0].astype(jnp.float32)                       # (H, W, C)
    scale = scale_ref[...].reshape(1, 1, C)
    shift = shift_ref[...].reshape(1, 1, C)

    # --- fused BN affine + ReLU (f32 VPU math; safe on v5e too) ---
    y = jnp.maximum(x * scale + shift, 0.0)                # (H, W, C)

    # --- zero only the 1-pixel halo of the padded scratch, then write the interior once ---
    zrow = jnp.zeros((1, W + 2, C), jnp.float32)
    zcol = jnp.zeros((H + 2, 1, C), jnp.float32)
    pad_ref[0:1, :, :] = zrow
    pad_ref[H + 1:H + 2, :, :] = zrow
    pad_ref[:, 0:1, :] = zcol
    pad_ref[:, W + 1:W + 2, :] = zcol
    pad_ref[1:H + 1, 1:W + 1, :] = y

    # --- 3x3 conv (padding=1, stride=1, no bias) as ONE im2col matmul on the MXU ---
    patches = jnp.concatenate(
        [pad_ref[dy:dy + H, dx:dx + W, :].reshape(H * W, C)
         for dy in range(3) for dx in range(3)],
        axis=-1,
    )                                                      # (H*W, 9*C)
    conv = jnp.dot(patches, w_ref[...], preferred_element_type=jnp.float32)  # (H*W, G)

    out_ref[...] = conv.reshape(1, H, W, G).astype(out_ref.dtype)


@jax.jit
def single_layer_forward(x_nchw, gamma, beta, w_oihw):
    """x_nchw: (N, C, H, W); gamma/beta: (C,); w_oihw: (G, C, 3, 3). Returns (N, C+G, H, W)."""
    N, C, H, W = x_nchw.shape
    G = w_oihw.shape[0]
    eps = 1e-5

    # --- BatchNorm2d training-mode batch stats, hoisted out of the kernel (two-pass, f32) ---
    xf = x_nchw.astype(jnp.float32)
    mean = jnp.mean(xf, axis=(0, 2, 3))                                    # (C,)
    var = jnp.mean(jnp.square(xf - mean.reshape(1, C, 1, 1)), axis=(0, 2, 3))
    inv = jax.lax.rsqrt(var + eps)
    scale = (gamma.astype(jnp.float32) * inv).reshape(1, C)
    shift = (beta.astype(jnp.float32) - mean * gamma.astype(jnp.float32) * inv).reshape(1, C)

    # NCHW -> NHWC for the kernel (channels on the lane axis).
    # TODO(synk): for a full NHWC DenseNet these transposes would be removed end-to-end.
    x_nhwc = jnp.transpose(x_nchw, (0, 2, 3, 1))
    # OIHW -> (ky, kx, C, G) -> (9*C, G) flat taps matching the in-kernel patch order.
    w_flat = jnp.transpose(w_oihw, (2, 3, 1, 0)).reshape(9 * C, G).astype(jnp.float32)

    conv_nhwc = pl.pallas_call(
        _single_layer_kernel,
        out_shape=jax.ShapeDtypeStruct((N, H, W, G), x_nchw.dtype),
        grid_spec=pltpu.PrefetchScalarGridSpec(
            num_scalar_prefetch=0,
            grid=(N,),  # one image per grid step; double-buffered by BlockSpec pipelining
            in_specs=[
                pl.BlockSpec((1, H, W, C), lambda n: (n, 0, 0, 0)),
                pl.BlockSpec((1, C), lambda n: (0, 0)),
                pl.BlockSpec((1, C), lambda n: (0, 0)),
                pl.BlockSpec((9 * C, G), lambda n: (0, 0)),
            ],
            out_specs=pl.BlockSpec((1, H, W, G), lambda n: (n, 0, 0, 0)),
            scratch_shapes=[pltpu.VMEM((H + 2, W + 2, C), jnp.float32)],
        ),
        compiler_params=pltpu.CompilerParams(
            dimension_semantics=("parallel",),  # independent per image -> megacore on v7x
        ),
    )(x_nhwc, scale, shift, w_flat)

    # Back to NCHW and concatenate the passthrough x in XLA (lane-dense, no extra VMEM copy).
    conv_nchw = jnp.transpose(conv_nhwc, (0, 3, 1, 2))
    return jnp.concatenate([x_nchw, conv_nchw.astype(x_nchw.dtype)], axis=1)


def _reference_forward(x_nchw, gamma, beta, w_oihw):
    """Pure-JAX reference of the PyTorch forward (training-mode BN)."""
    x = x_nchw.astype(jnp.float32)
    mean = jnp.mean(x, axis=(0, 2, 3), keepdims=True)
    var = jnp.mean((x - mean) ** 2, axis=(0, 2, 3), keepdims=True)
    y = (x - mean) * jax.lax.rsqrt(var + 1e-5)
    y = y * gamma.reshape(1, -1, 1, 1) + beta.reshape(1, -1, 1, 1)
    y = jnp.maximum(y, 0.0)
    conv = jax.lax.conv_general_dilated(
        y, w_oihw, window_strides=(1, 1), padding="SAME",
        dimension_numbers=("NCHW", "OIHW", "NCHW"),
    )
    return jnp.concatenate([x_nchw, conv.astype(x_nchw.dtype)], axis=1)


if __name__ == "__main__":
    N, C, H, W = 2, 4, 16, 16   # batch, nChannels, spatial
    G = 8                       # growthRate

    key = jax.random.PRNGKey(0)
    kx, kg, kb, kw = jax.random.split(key, 4)

    x = jax.random.normal(kx, (N, C, H, W), dtype=jnp.float32)
    gamma = 1.0 + 0.1 * jax.random.normal(kg, (C,), dtype=jnp.float32)  # BN weight
    beta = 0.1 * jax.random.normal(kb, (C,), dtype=jnp.float32)         # BN bias
    # Conv2d(C, G, kernel_size=3, padding=1, bias=False) weight, deterministic init.
    fan_in = C * 3 * 3
    w = jax.random.normal(kw, (G, C, 3, 3), dtype=jnp.float32) * (1.0 / fan_in) ** 0.5

    out = single_layer_forward(x, gamma, beta, w)
    out = jax.block_until_ready(out)

    ref = _reference_forward(x, gamma, beta, w)
    assert out.shape == (N, C + G, H, W), out.shape
    assert jnp.allclose(out, ref, atol=1e-4, rtol=1e-4), float(jnp.max(jnp.abs(out - ref)))

    print("KERNEL_OK")
</pallas_src>

<mosaic_0001>
module attributes {stable_mosaic.version = 11 : i64} {
  func.func @_single_layer_kernel(%arg0: i32, %arg1: memref<1x16x16x4xf32, #tpu.memory_space<vmem>>, %arg2: memref<1x4xf32, #tpu.memory_space<vmem>>, %arg3: memref<1x4xf32, #tpu.memory_space<vmem>>, %arg4: memref<36x8xf32, #tpu.memory_space<vmem>>, %arg5: memref<1x16x16x8xf32, #tpu.memory_space<vmem>>, %arg6: memref<18x18x4xf32, #tpu.memory_space<vmem>>) attributes {dimension_semantics = [#tpu.dimension_semantics<parallel>], iteration_bounds = array<i64: 2>, scalar_prefetch = 0 : i64, scratch_operands = 1 : i64, tpu.core_type = #tpu.core_type<tc>, window_params = [{transform_indices = @transform_0, window_bounds = array<i64: 1, 16, 16, 4>}, {pipeline_mode = #tpu.pipeline_mode<synchronous>, transform_indices = @transform_1, window_bounds = array<i64: 1, 4>}, {pipeline_mode = #tpu.pipeline_mode<synchronous>, transform_indices = @transform_2, window_bounds = array<i64: 1, 4>}, {pipeline_mode = #tpu.pipeline_mode<synchronous>, transform_indices = @transform_3, window_bounds = array<i64: 36, 8>}, {transform_indices = @transform_4, window_bounds = array<i64: 1, 16, 16, 8>}]} {
    %c0 = arith.constant 0 : index
    %c0_0 = arith.constant 0 : index
    %c0_1 = arith.constant 0 : index
    %c0_2 = arith.constant 0 : index
    %0 = vector.load %arg1[%c0, %c0_0, %c0_1, %c0_2] : memref<1x16x16x4xf32, #tpu.memory_space<vmem>>, vector<1x16x16x4xf32>
    %1 = vector.shape_cast %0 : vector<1x16x16x4xf32> to vector<16x16x4xf32>
    %c0_3 = arith.constant 0 : index
    %c0_4 = arith.constant 0 : index
    %2 = vector.load %arg2[%c0_3, %c0_4] : memref<1x4xf32, #tpu.memory_space<vmem>>, vector<1x4xf32>
    %3 = vector.shape_cast %2 : vector<1x4xf32> to vector<1x1x4xf32>
    %c0_5 = arith.constant 0 : index
    %c0_6 = arith.constant 0 : index
    %4 = vector.load %arg3[%c0_5, %c0_6] : memref<1x4xf32, #tpu.memory_space<vmem>>, vector<1x4xf32>
    %5 = vector.shape_cast %4 : vector<1x4xf32> to vector<1x1x4xf32>
    %6 = vector.broadcast %3 : vector<1x1x4xf32> to vector<16x16x4xf32>
    %7 = arith.mulf %1, %6 : vector<16x16x4xf32>
    %8 = vector.broadcast %5 : vector<1x1x4xf32> to vector<16x16x4xf32>
    %9 = arith.addf %7, %8 : vector<16x16x4xf32>
    %cst = arith.constant 0.000000e+00 : f32
    %10 = vector.broadcast %cst : f32 to vector<16x16x4xf32>
    %11 = arith.maximumf %9, %10 : vector<16x16x4xf32>
    %cst_7 = arith.constant 0.000000e+00 : f32
    %12 = vector.broadcast %cst_7 : f32 to vector<1x18x4xf32>
    %cst_8 = arith.constant 0.000000e+00 : f32
    %13 = vector.broadcast %cst_8 : f32 to vector<18x1x4xf32>
    %c0_9 = arith.constant 0 : index
    %c0_10 = arith.constant 0 : index
    %c0_11 = arith.constant 0 : index
    %14 = vector.load %arg6[%c0_9, %c0_10, %c0_11] : memref<18x18x4xf32, #tpu.memory_space<vmem>>, vector<1x18x4xf32>
    tpu.vector_store %arg6[%c0_9, %c0_10, %c0_11], %12 {strides = array<i32>} : memref<18x18x4xf32, #tpu.memory_space<vmem>>, vector<1x18x4xf32>,
    %c17 = arith.constant 17 : index
    %c0_12 = arith.constant 0 : index
    %c0_13 = arith.constant 0 : index
    %15 = vector.load %arg6[%c17, %c0_12, %c0_13] : memref<18x18x4xf32, #tpu.memory_space<vmem>>, vector<1x18x4xf32>
    tpu.vector_store %arg6[%c17, %c0_12, %c0_13], %12 {strides = array<i32>} : memref<18x18x4xf32, #tpu.memory_space<vmem>>, vector<1x18x4xf32>,
    %c0_14 = arith.constant 0 : index
    %c0_15 = arith.constant 0 : index
    %c0_16 = arith.constant 0 : index
    %16 = vector.load %arg6[%c0_14, %c0_15, %c0_16] : memref<18x18x4xf32, #tpu.memory_space<vmem>>, vector<18x1x4xf32>
    tpu.vector_store %arg6[%c0_14, %c0_15, %c0_16], %13 {strides = array<i32>} : memref<18x18x4xf32, #tpu.memory_space<vmem>>, vector<18x1x4xf32>,
    %c0_17 = arith.constant 0 : index
    %c17_18 = arith.constant 17 : index
    %c0_19 = arith.constant 0 : index
    %17 = vector.load %arg6[%c0_17, %c17_18, %c0_19] : memref<18x18x4xf32, #tpu.memory_space<vmem>>, vector<18x1x4xf32>
    tpu.vector_store %arg6[%c0_17, %c17_18, %c0_19], %13 {strides = array<i32>} : memref<18x18x4xf32, #tpu.memory_space<vmem>>, vector<18x1x4xf32>,
    %c1 = arith.constant 1 : index
    %c1_20 = arith.constant 1 : index
    %c0_21 = arith.constant 0 : index
    %18 = vector.load %arg6[%c1, %c1_20, %c0_21] : memref<18x18x4xf32, #tpu.memory_space<vmem>>, vector<16x16x4xf32>
    tpu.vector_store %arg6[%c1, %c1_20, %c0_21], %11 {strides = array<i32>} : memref<18x18x4xf32, #tpu.memory_space<vmem>>, vector<16x16x4xf32>,
    %c0_22 = arith.constant 0 : index
    %c0_23 = arith.constant 0 : index
    %c0_24 = arith.constant 0 : index
    %19 = vector.load %arg6[%c0_22, %c0_23, %c0_24] : memref<18x18x4xf32, #tpu.memory_space<vmem>>, vector<16x16x4xf32>
    %20 = vector.shape_cast %19 : vector<16x16x4xf32> to vector<256x4xf32>
    %c0_25 = arith.constant 0 : index
    %c1_26 = arith.constant 1 : index
    %c0_27 = arith.constant 0 : index
    %21 = vector.load %arg6[%c0_25, %c1_26, %c0_27] : memref<18x18x4xf32, #tpu.memory_space<vmem>>, vector<16x16x4xf32>
    %22 = vector.shape_cast %21 : vector<16x16x4xf32> to vector<256x4xf32>
    %c0_28 = arith.constant 0 : index
    %c2 = arith.constant 2 : index
    %c0_29 = arith.constant 0 : index
    %23 = vector.load %arg6[%c0_28, %c2, %c0_29] : memref<18x18x4xf32, #tpu.memory_space<vmem>>, vector<16x16x4xf32>
    %24 = vector.shape_cast %23 : vector<16x16x4xf32> to vector<256x4xf32>
    %c1_30 = arith.constant 1 : index
    %c0_31 = arith.constant 0 : index
    %c0_32 = arith.constant 0 : index
    %25 = vector.load %arg6[%c1_30, %c0_31, %c0_32] : memref<18x18x4xf32, #tpu.memory_space<vmem>>, vector<16x16x4xf32>
    %26 = vector.shape_cast %25 : vector<16x16x4xf32> to vector<256x4xf32>
    %c1_33 = arith.constant 1 : index
    %c1_34 = arith.constant 1 : index
    %c0_35 = arith.constant 0 : index
    %27 = vector.load %arg6[%c1_33, %c1_34, %c0_35] : memref<18x18x4xf32, #tpu.memory_space<vmem>>, vector<16x16x4xf32>
    %28 = vector.shape_cast %27 : vector<16x16x4xf32> to vector<256x4xf32>
    %c1_36 = arith.constant 1 : index
    %c2_37 = arith.constant 2 : index
    %c0_38 = arith.constant 0 : index
    %29 = vector.load %arg6[%c1_36, %c2_37, %c0_38] : memref<18x18x4xf32, #tpu.memory_space<vmem>>, vector<16x16x4xf32>
    %30 = vector.shape_cast %29 : vector<16x16x4xf32> to vector<256x4xf32>
    %c2_39 = arith.constant 2 : index
    %c0_40 = arith.constant 0 : index
    %c0_41 = arith.constant 0 : index
    %31 = vector.load %arg6[%c2_39, %c0_40, %c0_41] : memref<18x18x4xf32, #tpu.memory_space<vmem>>, vector<16x16x4xf32>
    %32 = vector.shape_cast %31 : vector<16x16x4xf32> to vector<256x4xf32>
    %c2_42 = arith.constant 2 : index
    %c1_43 = arith.constant 1 : index
    %c0_44 = arith.constant 0 : index
    %33 = vector.load %arg6[%c2_42, %c1_43, %c0_44] : memref<18x18x4xf32, #tpu.memory_space<vmem>>, vector<16x16x4xf32>
    %34 = vector.shape_cast %33 : vector<16x16x4xf32> to vector<256x4xf32>
    %c2_45 = arith.constant 2 : index
    %c2_46 = arith.constant 2 : index
    %c0_47 = arith.constant 0 : index
    %35 = vector.load %arg6[%c2_45, %c2_46, %c0_47] : memref<18x18x4xf32, #tpu.memory_space<vmem>>, vector<16x16x4xf32>
    %36 = vector.shape_cast %35 : vector<16x16x4xf32> to vector<256x4xf32>
    %37 = tpu.concatenate %20, %22, %24, %26, %28, %30, %32, %34, %36 in 1 : vector<256x4xf32>, vector<256x4xf32>, vector<256x4xf32>, vector<256x4xf32>, vector<256x4xf32>, vector<256x4xf32>, vector<256x4xf32>, vector<256x4xf32>, vector<256x4xf32> -> vector<256x36xf32>
    %c0_48 = arith.constant 0 : index
    %c0_49 = arith.constant 0 : index
    %38 = vector.load %arg4[%c0_48, %c0_49] : memref<36x8xf32, #tpu.memory_space<vmem>>, vector<36x8xf32>
    %cst_50 = arith.constant dense<0.000000e+00> : vector<256x8xf32>
    %39 = tpu.matmul %37, %38, %cst_50 {dimension_numbers = #tpu.dot_dimension_numbers<[1], [0], [0], [1], [0, 0, 1, 1], [], []>} : vector<256x36xf32>, vector<36x8xf32>, vector<256x8xf32> -> vector<256x8xf32>
    %40 = vector.shape_cast %39 : vector<256x8xf32> to vector<1x16x16x8xf32>
    %c0_51 = arith.constant 0 : index
    %c0_52 = arith.constant 0 : index
    %c0_53 = arith.constant 0 : index
    %c0_54 = arith.constant 0 : index
    %41 = vector.load %arg5[%c0_51, %c0_52, %c0_53, %c0_54] : memref<1x16x16x8xf32, #tpu.memory_space<vmem>>, vector<1x16x16x8xf32>
    tpu.vector_store %arg5[%c0_51, %c0_52, %c0_53, %c0_54], %40 {strides = array<i32>} : memref<1x16x16x8xf32, #tpu.memory_space<vmem>>, vector<1x16x16x8xf32>,
    return
  }
  func.func @transform_0(%arg0: i32) -> (i32, i32, i32, i32) {
    %c0_i32 = arith.constant 0 : i32
    %c0_i32_0 = arith.constant 0 : i32
    %c0_i32_1 = arith.constant 0 : i32
    %c0_i32_2 = arith.constant 0 : i32
    return %arg0, %c0_i32, %c0_i32_0, %c0_i32_1 : i32, i32, i32, i32
  }
  func.func @transform_1(%arg0: i32) -> (i32, i32) {
    %c0_i32 = arith.constant 0 : i32
    %c0_i32_0 = arith.constant 0 : i32
    %c0_i32_1 = arith.constant 0 : i32
    return %c0_i32, %c0_i32_0 : i32, i32
  }
  func.func @transform_2(%arg0: i32) -> (i32, i32) {
    %c0_i32 = arith.constant 0 : i32
    %c0_i32_0 = arith.constant 0 : i32
    %c0_i32_1 = arith.constant 0 : i32
    return %c0_i32, %c0_i32_0 : i32, i32
  }
  func.func @transform_3(%arg0: i32) -> (i32, i32) {
    %c0_i32 = arith.constant 0 : i32
    %c0_i32_0 = arith.constant 0 : i32
    %c0_i32_1 = arith.constant 0 : i32
    return %c0_i32, %c0_i32_0 : i32, i32
  }
  func.func @transform_4(%arg0: i32) -> (i32, i32, i32, i32) {
    %c0_i32 = arith.constant 0 : i32
    %c0_i32_0 = arith.constant 0 : i32
    %c0_i32_1 = arith.constant 0 : i32
    %c0_i32_2 = arith.constant 0 : i32
    return %arg0, %c0_i32, %c0_i32_0, %c0_i32_1 : i32, i32, i32, i32
  }
}

</mosaic_0001>

<llo_original>
// kernel: single_layer_forward.1
$region0: #{single_layer_forward.1}
  #allocation0 [shape = 'u32[]', space=smem, size = 0x4, offset = 0x4, fixed_abs, tag = 'smem constant byte address 0x4 - core index']
  #allocation1 [shape = 'u32[144,128]{1,0:T(1,128)}', space=vmem, size = 0x12000, scoped, tag = 'internal scratch']
  #allocation2 [shape = 'f32[18,18,4]{2,1,0:T(8,128)}', space=vmem, size = 0x36000, scoped, tag = 'scratch operand']
  %s0 = inlined_call_operand.vmem [shape: f32[2,16,16,4], index: 0, kind: input, shape index: {}]
  %s1 = inlined_call_operand.vmem [shape: f32[1,4], index: 1, kind: input, shape index: {}]
  %s2 = inlined_call_operand.vmem [shape: f32[1,4], index: 2, kind: input, shape index: {}]
  %s3 = inlined_call_operand.vmem [shape: f32[36,8], index: 3, kind: input, shape index: {}]
  %s4 = inlined_call_operand.vmem [shape: f32[2,16,16,8], index: 4, kind: output, shape index: {}]
  %s5 = sld [smem:[#allocation0]]
  $region49: #{single_layer_forward.1} parent=0
    _
  %s7 = ssub.s32 1, %s5
  %s8 = scalar_select 0, %s7, %s5
  loop: start=0, step=1, limit=4
  $region2: #{single_layer_forward.1} parent=0 // loop_pre_header
    _
  $region3: #{single_layer_forward.1} parent=0 // loop_header
    %s10 = sphi 0, %s14
    %p11 = scmp.ge.s32.totalorder %s10, 4
    %s20 = sphi 0, %s22
    %s23 = sphi 0, %s20
    %s24 = sphi 0, %s23
    %s40 = sphi 0, %s24
    %s44 = sphi 0, %s44
    %s46 = sphi 0, %s44
    %s47 = sphi 0, %s46
    %s61 = sphi 0, %s47
    %s65 = sphi 0, %s65
    %s67 = sphi 0, %s65
    %s68 = sphi 0, %s67
    %s82 = sphi 0, %s68
    %s86 = sphi 0, %s86
    %s88 = sphi 0, %s86
    %s89 = sphi 0, %s88
    %s103 = sphi 0, %s89
    %s109 = sphi 0, %s111
    %s112 = sphi 0, %s109
    %s113 = sphi 0, %s112
    %s129 = sphi 0, %s113
  $region4: #{single_layer_forward.1} parent=0 // loop_header_branch
    %13 = sbr.rel (%p11) target = $region8
  $region5: #{single_layer_forward.1} parent=0 // loop_body
    %s15 = ssub.s32 %s10, 1
    %s16 = ssub.s32 %s10, 2
    %s17 = sadd.s32 %s10, 1
    %s18 = ssub.s32 %s10, %s17
    %p19 = scmp.eq.s32.totalorder %s18, 0
    %s21 = sadd.s32 %s20, 1
    %s22 = scalar_select %p19, %s20, %s21
    %p25 = pneg %p19
    %p26 = scmp.eq.s32.totalorder %s10, 1
    %p27 = por %p25, %p26
    %p28 = scmp.ne.s32.totalorder %s20, %s23
    %p29 = scmp.eq.s32.totalorder %s10, 0
    %p30 = por %p28, %p29
    %p31 = scmp.ne.s32.totalorder %s20, %s23
    %p32 = scmp.eq.s32.totalorder %s15, 1
    %p33 = por %p31, %p32
    %p34 = scmp.ne.s32.totalorder %s23, %s24
    %p35 = scmp.eq.s32.totalorder %s15, 0
    %p36 = por %p34, %p35
    %p37 = scmp.ne.s32.totalorder %s23, %s24
    %p38 = scmp.eq.s32.totalorder %s16, 1
    %p39 = por %p37, %p38
    %p41 = scmp.ne.s32.totalorder %s24, %s40
    %p42 = scmp.eq.s32.totalorder %s16, 0
    %p43 = por %p41, %p42
    %s45 = sadd.s32 %s44, 1
    %p48 = scmp.eq.s32.totalorder %s10, 1
    %p49 = scmp.ne.s32.totalorder %s44, %s46
    %p50 = scmp.eq.s32.totalorder %s10, 0
    %p51 = por %p49, %p50
    %p52 = scmp.ne.s32.totalorder %s44, %s46
    %p53 = scmp.eq.s32.totalorder %s15, 1
    %p54 = por %p52, %p53
    %p55 = scmp.ne.s32.totalorder %s46, %s47
    %p56 = scmp.eq.s32.totalorder %s15, 0
    %p57 = por %p55, %p56
    %p58 = scmp.ne.s32.totalorder %s46, %s47
    %p59 = scmp.eq.s32.totalorder %s16, 1
    %p60 = por %p58, %p59
    %p62 = scmp.ne.s32.totalorder %s47, %s61
    %p63 = scmp.eq.s32.totalorder %s16, 0
    %p64 = por %p62, %p63
    %s66 = sadd.s32 %s65, 1
    %p69 = scmp.eq.s32.totalorder %s10, 1
    %p70 = scmp.ne.s32.totalorder %s65, %s67
    %p71 = scmp.eq.s32.totalorder %s10, 0
    %p72 = por %p70, %p71
    %p73 = scmp.ne.s32.totalorder %s65, %s67
    %p74 = scmp.eq.s32.totalorder %s15, 1
    %p75 = por %p73, %p74
    %p76 = scmp.ne.s32.totalorder %s67, %s68
    %p77 = scmp.eq.s32.totalorder %s15, 0
    %p78 = por %p76, %p77
    %p79 = scmp.ne.s32.totalorder %s67, %s68
    %p80 = scmp.eq.s32.totalorder %s16, 1
    %p81 = por %p79, %p80
    %p83 = scmp.ne.s32.totalorder %s68, %s82
    %p84 = scmp.eq.s32.totalorder %s16, 0
    %p85 = por %p83, %p84
    %s87 = sadd.s32 %s86, 1
    %p90 = scmp.eq.s32.totalorder %s10, 1
    %p91 = scmp.ne.s32.totalorder %s86, %s88
    %p92 = scmp.eq.s32.totalorder %s10, 0
    %p93 = por %p91, %p92
    %p94 = scmp.ne.s32.totalorder %s86, %s88
    %p95 = scmp.eq.s32.totalorder %s15, 1
    %p96 = por %p94, %p95
    %p97 = scmp.ne.s32.totalorder %s88, %s89
    %p98 = scmp.eq.s32.totalorder %s15, 0
    %p99 = por %p97, %p98
    %p100 = scmp.ne.s32.totalorder %s88, %s89
    %p101 = scmp.eq.s32.totalorder %s16, 1
    %p102 = por %p100, %p101
    %p104 = scmp.ne.s32.totalorder %s89, %s103
    %p105 = scmp.eq.s32.totalorder %s16, 0
    %p106 = por %p104, %p105
    %s107 = ssub.s32 %s10, %s17
    %p108 = scmp.eq.s32.totalorder %s107, 0
    %s110 = sadd.s32 %s109, 1
    %s111 = scalar_select %p108, %s109, %s110
    %p114 = pneg %p108
    %p115 = scmp.eq.s32.totalorder %s10, 1
    %p116 = por %p114, %p115
    %p117 = scmp.ne.s32.totalorder %s109, %s112
    %p118 = scmp.eq.s32.totalorder %s10, 0
    %p119 = por %p117, %p118
    %p120 = scmp.ne.s32.totalorder %s109, %s112
    %p121 = scmp.eq.s32.totalorder %s15, 1
    %p122 = por %p120, %p121
    %p123 = scmp.ne.s32.totalorder %s112, %s113
    %p124 = scmp.eq.s32.totalorder %s15, 0
    %p125 = por %p123, %p124
    %p126 = scmp.ne.s32.totalorder %s112, %s113
    %p127 = scmp.eq.s32.totalorder %s16, 1
    %p128 = por %p126, %p127
    %p130 = scmp.ne.s32.totalorder %s113, %s129
    %p131 = scmp.eq.s32.totalorder %s16, 0
    %p132 = por %p130, %p131
    %p133 = scmp.le.s32.totalorder 1, %s10
    %p134 = scmp.lt.s32.totalorder %s10, 3
    %p135 = pnand %p133, %p134
    %p136 = pneg %p135
    // Predicated region
    $region9: #{single_layer_forward.1} parent=5 // pred_check
      _
    $region10: #{single_layer_forward.1} parent=5 // pred_check_branch
      %138 = sbr.rel (%p135) target = $region12
    $region11: #{single_layer_forward.1} parent=5 // pred_region
      %s139 = ssub.s32 %s10, 1
      // Predicated region
      $region13: #{single_layer_forward.1} parent=11 // pred_check
        %p140 = pneg %p57
      $region14: #{single_layer_forward.1} parent=11 // pred_check_branch
        %142 = sbr.rel (%p140) target = $region16
      $region15: #{single_layer_forward.1} parent=11 // pred_region
        _
      $region16: #{single_layer_forward.1} parent=11 // pred_fallthru
        _
      // Predicated region
      $region17: #{single_layer_forward.1} parent=11 // pred_check
        %p143 = pneg %p78
      $region18: #{single_layer_forward.1} parent=11 // pred_check_branch
        %145 = sbr.rel (%p143) target = $region20
      $region19: #{single_layer_forward.1} parent=11 // pred_region
        _
      $region20: #{single_layer_forward.1} parent=11 // pred_fallthru
        _
      // Predicated region
      $region21: #{single_layer_forward.1} parent=11 // pred_check
        %p146 = pneg %p99
      $region22: #{single_layer_forward.1} parent=11 // pred_check_branch
        %148 = sbr.rel (%p146) target = $region24
      $region23: #{single_layer_forward.1} parent=11 // pred_region
        _
      $region24: #{single_layer_forward.1} parent=11 // pred_fallthru
        _
    $region12: #{single_layer_forward.1} parent=5 // pred_fallthru
      _
    %p149 = scmp.lt.s32.totalorder %s10, 2
    // Predicated region
    $region25: #{single_layer_forward.1} parent=5 // pred_check
      %p150 = pneg %p149
    $region26: #{single_layer_forward.1} parent=5 // pred_check_branch
      %152 = sbr.rel (%p150) target = $region28
    $region27: #{single_layer_forward.1} parent=5 // pred_region
      // Predicated region
      $region29: #{single_layer_forward.1} parent=27 // pred_check
        %p153 = pneg %p30
      $region30: #{single_layer_forward.1} parent=27 // pred_check_branch
        %155 = sbr.rel (%p153) target = $region32
      $region31: #{single_layer_forward.1} parent=27 // pred_region
        %p156 = scmp.lt.s32.totalorder %s10, 1
        %s157 = scalar_select %p156, %s10, 1
        %s158 = smul.addr %s157, 32
        %s159 = smul.addr %s158, 8
        %s160 = scalar_lea.vmem %s0, %s159
      $region32: #{single_layer_forward.1} parent=27 // pred_fallthru
        _
    $region28: #{single_layer_forward.1} parent=5 // pred_fallthru
      _
    %p161 = scmp.le.s32.totalorder 1, %s10
    %p162 = scmp.lt.s32.totalorder %s10, 3
    %p163 = pnand %p161, %p162
    %p164 = pneg %p163
    // Predicated region
    $region33: #{single_layer_forward.1} parent=5 // pred_check
      _
    $region34: #{single_layer_forward.1} parent=5 // pred_check_branch
      %166 = sbr.rel (%p163) target = $region36
    $region35: #{single_layer_forward.1} parent=5 // pred_region
      %s167 = ssub.s32 %s10, 1
      %p168 = scmp.lt.s32.totalorder %s15, 1
      %s169 = scalar_select %p168, %s15, 1
      %s170 = smul.addr %s169, 32
      %s171 = smul.addr %s170, 8
      %s172 = scalar_lea.vmem %s0, %s171
      %p173 = pneg %p36
      %p174 = pneg %p33
      %p175 = pneg %p57
      %p176 = pneg %p54
      %p177 = pneg %p78
      %p178 = pneg %p75
      %p179 = pneg %p99
      %p180 = pneg %p96
      %p181 = pneg %p125
      %p182 = pneg %p122
      %p183 = scmp.lt.s32.totalorder %s15, 1
      %s184 = scalar_select %p183, %s15, 1
      %s185 = smul.addr %s184, 32
      %s186 = smul.addr %s185, 8
      %s187 = scalar_lea.vmem %s4, %s186
      %p188 = scmp.lt.s32.totalorder %s15, 1
      %s189 = scalar_select %p188, %s15, 1
      %s190 = smul.addr %s189, 32
      %s191 = smul.addr %s190, 8
      %s192 = scalar_lea.vmem %s0, %s191
      %p193 = scmp.lt.s32.totalorder %s15, 1
      %s194 = scalar_select %p193, %s15, 1
      %s195 = smul.addr %s194, 32
      %s196 = smul.addr %s195, 8
      %s197 = scalar_lea.vmem %s4, %s196
      %v198 = vld [vmem:[%s192] sm:$0xff]
      %v199 = vld [vmem:[%s192 + $0x8] sm:$0xff]
      %v200 = vld [vmem:[%s192 + $0x10] sm:$0xff]
      %v201 = vld [vmem:[%s192 + $0x18] sm:$0xff]
      %v202 = vld [vmem:[%s192 + $0x20] sm:$0xff]
      %v203 = vld [vmem:[%s192 + $0x28] sm:$0xff]
      %v204 = vld [vmem:[%s192 + $0x30] sm:$0xff]
      %v205 = vld [vmem:[%s192 + $0x38] sm:$0xff]
      %v206 = vld [vmem:[%s192 + $0x40] sm:$0xff]
      %v207 = vld [vmem:[%s192 + $0x48] sm:$0xff]
      %v208 = vld [vmem:[%s192 + $0x50] sm:$0xff]
      %v209 = vld [vmem:[%s192 + $0x58] sm:$0xff]
      %v210 = vld [vmem:[%s192 + $0x60] sm:$0xff]
      %v211 = vld [vmem:[%s192 + $0x68] sm:$0xff]
      %v212 = vld [vmem:[%s192 + $0x70] sm:$0xff]
      %v213 = vld [vmem:[%s192 + $0x78] sm:$0xff]
      %v214 = vld [vmem:[%s192 + $0x80] sm:$0xff]
      %v215 = vld [vmem:[%s192 + $0x88] sm:$0xff]
      %v216 = vld [vmem:[%s192 + $0x90] sm:$0xff]
      %v217 = vld [vmem:[%s192 + $0x98] sm:$0xff]
      %v218 = vld [vmem:[%s192 + $0xa0] sm:$0xff]
      %v219 = vld [vmem:[%s192 + $0xa8] sm:$0xff]
      %v220 = vld [vmem:[%s192 + $0xb0] sm:$0xff]
      %v221 = vld [vmem:[%s192 + $0xb8] sm:$0xff]
      %v222 = vld [vmem:[%s192 + $0xc0] sm:$0xff]
      %v223 = vld [vmem:[%s192 + $0xc8] sm:$0xff]
      %v224 = vld [vmem:[%s192 + $0xd0] sm:$0xff]
      %v225 = vld [vmem:[%s192 + $0xd8] sm:$0xff]
      %v226 = vld [vmem:[%s192 + $0xe0] sm:$0xff]
      %v227 = vld [vmem:[%s192 + $0xe8] sm:$0xff]
      %v228 = vld [vmem:[%s192 + $0xf0] sm:$0xff]
      %v229 = vld [vmem:[%s192 + $0xf8] sm:$0xff]
      %v230 = vld [vmem:[%s1] sm:$0x1]
      %v231 = vld [vmem:[%s2] sm:$0x1]
      %v233 = vlaneseq
      %v234 = vshrl.u32 %v233, 7
      %v235 = vsub.s32 0, %v234
      %v236 = vrot.slane %v230, %v235
      %v238 = vmul.f32 %v198, %v236
      %v239 = vmul.f32 %v199, %v236
      %v240 = vmul.f32 %v200, %v236
      %v241 = vmul.f32 %v201, %v236
      %v242 = vmul.f32 %v202, %v236
      %v243 = vmul.f32 %v203, %v236
      %v244 = vmul.f32 %v204, %v236
      %v245 = vmul.f32 %v205, %v236
      %v246 = vmul.f32 %v206, %v236
      %v247 = vmul.f32 %v207, %v236
      %v248 = vmul.f32 %v208, %v236
      %v249 = vmul.f32 %v209, %v236
      %v250 = vmul.f32 %v210, %v236
      %v251 = vmul.f32 %v211, %v236
      %v252 = vmul.f32 %v212, %v236
      %v253 = vmul.f32 %v213, %v236
      %v254 = vmul.f32 %v214, %v236
      %v255 = vmul.f32 %v215, %v236
      %v256 = vmul.f32 %v216, %v236
      %v257 = vmul.f32 %v217, %v236
      %v258 = vmul.f32 %v218, %v236
      %v259 = vmul.f32 %v219, %v236
      %v260 = vmul.f32 %v220, %v236
      %v261 = vmul.f32 %v221, %v236
      %v262 = vmul.f32 %v222, %v236
      %v263 = vmul.f32 %v223, %v236
      %v264 = vmul.f32 %v224, %v236
      %v265 = vmul.f32 %v225, %v236
      %v266 = vmul.f32 %v226, %v236
      %v267 = vmul.f32 %v227, %v236
      %v268 = vmul.f32 %v228, %v236
      %v269 = vmul.f32 %v229, %v236
      %v271 = vlaneseq
      %v272 = vshrl.u32 %v271, 7
      %v273 = vsub.s32 0, %v272
      %v274 = vrot.slane %v231, %v273
      %v276 = vadd.f32 %v238, %v274
      %v277 = vadd.f32 %v239, %v274
      %v278 = vadd.f32 %v240, %v274
      %v279 = vadd.f32 %v241, %v274
      %v280 = vadd.f32 %v242, %v274
      %v281 = vadd.f32 %v243, %v274
      %v282 = vadd.f32 %v244, %v274
      %v283 = vadd.f32 %v245, %v274
      %v284 = vadd.f32 %v246, %v274
      %v285 = vadd.f32 %v247, %v274
      %v286 = vadd.f32 %v248, %v274
      %v287 = vadd.f32 %v249, %v274
      %v288 = vadd.f32 %v250, %v274
      %v289 = vadd.f32 %v251, %v274
      %v290 = vadd.f32 %v252, %v274
      %v291 = vadd.f32 %v253, %v274
      %v292 = vadd.f32 %v254, %v274
      %v293 = vadd.f32 %v255, %v274
      %v294 = vadd.f32 %v256, %v274
      %v295 = vadd.f32 %v257, %v274
      %v296 = vadd.f32 %v258, %v274
      %v297 = vadd.f32 %v259, %v274
      %v298 = vadd.f32 %v260, %v274
      %v299 = vadd.f32 %v261, %v274
      %v300 = vadd.f32 %v262, %v274
      %v301 = vadd.f32 %v263, %v274
      %v302 = vadd.f32 %v264, %v274
      %v303 = vadd.f32 %v265, %v274
      %v304 = vadd.f32 %v266, %v274
      %v305 = vadd.f32 %v267, %v274
      %v306 = vadd.f32 %v268, %v274
      %v307 = vadd.f32 %v269, %v274
      %v308 = vmax.f32 %v276, 0.0
      %v309 = vmax.f32 %v277, 0.0
      %v310 = vmax.f32 %v278, 0.0
      %v311 = vmax.f32 %v279, 0.0
      %v312 = vmax.f32 %v280, 0.0
      %v313 = vmax.f32 %v281, 0.0
      %v314 = vmax.f32 %v282, 0.0
      %v315 = vmax.f32 %v283, 0.0
      %v316 = vmax.f32 %v284, 0.0
      %v317 = vmax.f32 %v285, 0.0
      %v318 = vmax.f32 %v286, 0.0
      %v319 = vmax.f32 %v287, 0.0
      %v320 = vmax.f32 %v288, 0.0
      %v321 = vmax.f32 %v289, 0.0
      %v322 = vmax.f32 %v290, 0.0
      %v323 = vmax.f32 %v291, 0.0
      %v324 = vmax.f32 %v292, 0.0
      %v325 = vmax.f32 %v293, 0.0
      %v326 = vmax.f32 %v294, 0.0
      %v327 = vmax.f32 %v295, 0.0
      %v328 = vmax.f32 %v296, 0.0
      %v329 = vmax.f32 %v297, 0.0
      %v330 = vmax.f32 %v298, 0.0
      %v331 = vmax.f32 %v299, 0.0
      %v332 = vmax.f32 %v300, 0.0
      %v333 = vmax.f32 %v301, 0.0
      %v334 = vmax.f32 %v302, 0.0
      %v335 = vmax.f32 %v303, 0.0
      %v336 = vmax.f32 %v304, 0.0
      %v337 = vmax.f32 %v305, 0.0
      %v338 = vmax.f32 %v306, 0.0
      %v339 = vmax.f32 %v307, 0.0
      %vm340 = vcmask 31744
      %341 = vst.msk [vmem:[#allocation2] sm:$0xff] %vm340, 0.0
      %342 = vst.msk [vmem:[#allocation2 + $0x8] sm:$0xff] %vm340, 0.0
      %vm343 = vcmask 25600
      %344 = vst.msk [vmem:[#allocation2 + $0x10] sm:$0x3] %vm343, 0.0
      %s345 = scalar_lea.vmem [#allocation2], 408
      %346 = vst.msk [vmem:[%s345] sm:$0xff] %vm340, 0.0
      %347 = vst.msk [vmem:[%s345 + $0x8] sm:$0xff] %vm340, 0.0
      %348 = vst.msk [vmem:[%s345 + $0x10] sm:$0x3] %vm343, 0.0
      %vm349 = vcmask 24576
      %350 = vst.msk [vmem:[#allocation2] sm:$0x1] %vm349, 0.0
      %351 = vst.msk [vmem:[#allocation2 + $0x18] sm:$0x1] %vm349, 0.0
      %352 = vst.msk [vmem:[#allocation2 + $0x30] sm:$0x1] %vm349, 0.0
      %353 = vst.msk [vmem:[#allocation2 + $0x48] sm:$0x1] %vm349, 0.0
      %354 = vst.msk [vmem:[#allocation2 + $0x60] sm:$0x1] %vm349, 0.0
      %355 = vst.msk [vmem:[#allocation2 + $0x78] sm:$0x1] %vm349, 0.0
      %356 = vst.msk [vmem:[#allocation2 + $0x90] sm:$0x1] %vm349, 0.0
      %357 = vst.msk [vmem:[#allocation2 + $0xa8] sm:$0x1] %vm349, 0.0
      %358 = vst.msk [vmem:[#allocation2 + $0xc0] sm:$0x1] %vm349, 0.0
      %359 = vst.msk [vmem:[#allocation2 + $0xd8] sm:$0x1] %vm349, 0.0
      %360 = vst.msk [vmem:[#allocation2 + $0xf0] sm:$0x1] %vm349, 0.0
      %361 = vst.msk [vmem:[#allocation2 + $0x108] sm:$0x1] %vm349, 0.0
      %362 = vst.msk [vmem:[#allocation2 + $0x120] sm:$0x1] %vm349, 0.0
      %363 = vst.msk [vmem:[#allocation2 + $0x138] sm:$0x1] %vm349, 0.0
      %364 = vst.msk [vmem:[#allocation2 + $0x150] sm:$0x1] %vm349, 0.0
      %365 = vst.msk [vmem:[#allocation2 + $0x168] sm:$0x1] %vm349, 0.0
      %366 = vst.msk [vmem:[#allocation2 + $0x180] sm:$0x1] %vm349, 0.0
      %367 = vst.msk [vmem:[#allocation2 + $0x198] sm:$0x1] %vm349, 0.0
      %368 = vst.msk [vmem:[#allocation2 + $0x11] sm:$0x1] %vm349, 0.0
      %369 = vst.msk [vmem:[#allocation2 + $0x29] sm:$0x1] %vm349, 0.0
      %370 = vst.msk [vmem:[#allocation2 + $0x41] sm:$0x1] %vm349, 0.0
      %371 = vst.msk [vmem:[#allocation2 + $0x59] sm:$0x1] %vm349, 0.0
      %372 = vst.msk [vmem:[#allocation2 + $0x71] sm:$0x1] %vm349, 0.0
      %373 = vst.msk [vmem:[#allocation2 + $0x89] sm:$0x1] %vm349, 0.0
      %374 = vst.msk [vmem:[#allocation2 + $0xa1] sm:$0x1] %vm349, 0.0
      %375 = vst.msk [vmem:[#allocation2 + $0xb9] sm:$0x1] %vm349, 0.0
      %376 = vst.msk [vmem:[#allocation2 + $0xd1] sm:$0x1] %vm349, 0.0
      %377 = vst.msk [vmem:[#allocation2 + $0xe9] sm:$0x1] %vm349, 0.0
      %378 = vst.msk [vmem:[#allocation2 + $0x101] sm:$0x1] %vm349, 0.0
      %379 = vst.msk [vmem:[#allocation2 + $0x119] sm:$0x1] %vm349, 0.0
      %380 = vst.msk [vmem:[#allocation2 + $0x131] sm:$0x1] %vm349, 0.0
      %381 = vst.msk [vmem:[#allocation2 + $0x149] sm:$0x1] %vm349, 0.0
      %382 = vst.msk [vmem:[#allocation2 + $0x161] sm:$0x1] %vm349, 0.0
      %383 = vst.msk [vmem:[#allocation2 + $0x179] sm:$0x1] %vm349, 0.0
      %384 = vst.msk [vmem:[#allocation2 + $0x191] sm:$0x1] %vm349, 0.0
      %385 = vst.msk [vmem:[#allocation2 + $0x1a9] sm:$0x1] %vm349, 0.0
      %s386 = scalar_lea.vmem [#allocation2], 24
      %387 = vst.msk [vmem:[%s386 + $0x1] sm:$0xff] %vm340, %v308
      %388 = vst.msk [vmem:[%s386 + $0x9] sm:$0xff] %vm340, %v309
      %389 = vst.msk [vmem:[%s386 + $0x19] sm:$0xff] %vm340, %v310
      %390 = vst.msk [vmem:[%s386 + $0x21] sm:$0xff] %vm340, %v311
      %391 = vst.msk [vmem:[%s386 + $0x31] sm:$0xff] %vm340, %v312
      %392 = vst.msk [vmem:[%s386 + $0x39] sm:$0xff] %vm340, %v313
      %393 = vst.msk [vmem:[%s386 + $0x49] sm:$0xff] %vm340, %v314
      %394 = vst.msk [vmem:[%s386 + $0x51] sm:$0xff] %vm340, %v315
      %395 = vst.msk [vmem:[%s386 + $0x61] sm:$0xff] %vm340, %v316
      %396 = vst.msk [vmem:[%s386 + $0x69] sm:$0xff] %vm340, %v317
      %397 = vst.msk [vmem:[%s386 + $0x79] sm:$0xff] %vm340, %v318
      %398 = vst.msk [vmem:[%s386 + $0x81] sm:$0xff] %vm340, %v319
      %399 = vst.msk [vmem:[%s386 + $0x91] sm:$0xff] %vm340, %v320
      %400 = vst.msk [vmem:[%s386 + $0x99] sm:$0xff] %vm340, %v321
      %401 = vst.msk [vmem:[%s386 + $0xa9] sm:$0xff] %vm340, %v322
      %402 = vst.msk [vmem:[%s386 + $0xb1] sm:$0xff] %vm340, %v323
      %403 = vst.msk [vmem:[%s386 + $0xc1] sm:$0xff] %vm340, %v324
      %404 = vst.msk [vmem:[%s386 + $0xc9] sm:$0xff] %vm340, %v325
      %405 = vst.msk [vmem:[%s386 + $0xd9] sm:$0xff] %vm340, %v326
      %406 = vst.msk [vmem:[%s386 + $0xe1] sm:$0xff] %vm340, %v327
      %407 = vst.msk [vmem:[%s386 + $0xf1] sm:$0xff] %vm340, %v328
      %408 = vst.msk [vmem:[%s386 + $0xf9] sm:$0xff] %vm340, %v329
      %409 = vst.msk [vmem:[%s386 + $0x109] sm:$0xff] %vm340, %v330
      %410 = vst.msk [vmem:[%s386 + $0x111] sm:$0xff] %vm340, %v331
      %411 = vst.msk [vmem:[%s386 + $0x121] sm:$0xff] %vm340, %v332
      %412 = vst.msk [vmem:[%s386 + $0x129] sm:$0xff] %vm340, %v333
      %413 = vst.msk [vmem:[%s386 + $0x139] sm:$0xff] %vm340, %v334
      %414 = vst.msk [vmem:[%s386 + $0x141] sm:$0xff] %vm340, %v335
      %415 = vst.msk [vmem:[%s386 + $0x151] sm:$0xff] %vm340, %v336
      %416 = vst.msk [vmem:[%s386 + $0x159] sm:$0xff] %vm340, %v337
      %417 = vst.msk [vmem:[%s386 + $0x169] sm:$0xff] %vm340, %v338
      %418 = vst.msk [vmem:[%s386 + $0x171] sm:$0xff] %vm340, %v339
      %v419 = vld [vmem:[#allocation2] sm:$0xff]
      %v420 = vld [vmem:[#allocation2 + $0x8] sm:$0xff]
      %v421 = vld [vmem:[#allocation2 + $0x18] sm:$0xff]
      %v422 = vld [vmem:[#allocation2 + $0x20] sm:$0xff]
      %v423 = vld [vmem:[#allocation2 + $0x30] sm:$0xff]
      %v424 = vld [vmem:[#allocation2 + $0x38] sm:$0xff]
      %v425 = vld [vmem:[#allocation2 + $0x48] sm:$0xff]
      %v426 = vld [vmem:[#allocation2 + $0x50] sm:$0xff]
      %v427 = vld [vmem:[#allocation2 + $0x60] sm:$0xff]
      %v428 = vld [vmem:[#allocation2 + $0x68] sm:$0xff]
      %v429 = vld [vmem:[#allocation2 + $0x78] sm:$0xff]
      %v430 = vld [vmem:[#allocation2 + $0x80] sm:$0xff]
      %v431 = vld [vmem:[#allocation2 + $0x90] sm:$0xff]
      %v432 = vld [vmem:[#allocation2 + $0x98] sm:$0xff]
      %v433 = vld [vmem:[#allocation2 + $0xa8] sm:$0xff]
      %v434 = vld [vmem:[#allocation2 + $0xb0] sm:$0xff]
      %v435 = vld [vmem:[#allocation2 + $0xc0] sm:$0xff]
      %v436 = vld [vmem:[#allocation2 + $0xc8] sm:$0xff]
      %v437 = vld [vmem:[#allocation2 + $0xd8] sm:$0xff]
      %v438 = vld [vmem:[#allocation2 + $0xe0] sm:$0xff]
      %v439 = vld [vmem:[#allocation2 + $0xf0] sm:$0xff]
      %v440 = vld [vmem:[#allocation2 + $0xf8] sm:$0xff]
      %v441 = vld [vmem:[#allocation2 + $0x108] sm:$0xff]
      %v442 = vld [vmem:[#allocation2 + $0x110] sm:$0xff]
      %v443 = vld [vmem:[#allocation2 + $0x120] sm:$0xff]
      %v444 = vld [vmem:[#allocation2 + $0x128] sm:$0xff]
      %v445 = vld [vmem:[#allocation2 + $0x138] sm:$0xff]
      %v446 = vld [vmem:[#allocation2 + $0x140] sm:$0xff]
      %v447 = vld [vmem:[#allocation2 + $0x150] sm:$0xff]
      %v448 = vld [vmem:[#allocation2 + $0x158] sm:$0xff]
      %v449 = vld [vmem:[#allocation2 + $0x168] sm:$0xff]
      %v450 = vld [vmem:[#allocation2 + $0x170] sm:$0xff]
      %v451 = vld [vmem:[#allocation2 + $0x1] sm:$0xff]
      %v452 = vld [vmem:[#allocation2 + $0x9] sm:$0xff]
      %v453 = vld [vmem:[#allocation2 + $0x19] sm:$0xff]
      %v454 = vld [vmem:[#allocation2 + $0x21] sm:$0xff]
      %v455 = vld [vmem:[#allocation2 + $0x31] sm:$0xff]
      %v456 = vld [vmem:[#allocation2 + $0x39] sm:$0xff]
      %v457 = vld [vmem:[#allocation2 + $0x49] sm:$0xff]
      %v458 = vld [vmem:[#allocation2 + $0x51] sm:$0xff]
      %v459 = vld [vmem:[#allocation2 + $0x61] sm:$0xff]
      %v460 = vld [vmem:[#allocation2 + $0x69] sm:$0xff]
      %v461 = vld [vmem:[#allocation2 + $0x79] sm:$0xff]
      %v462 = vld [vmem:[#allocation2 + $0x81] sm:$0xff]
      %v463 = vld [vmem:[#allocation2 + $0x91] sm:$0xff]
      %v464 = vld [vmem:[#allocation2 + $0x99] sm:$0xff]
      %v465 = vld [vmem:[#allocation2 + $0xa9] sm:$0xff]
      %v466 = vld [vmem:[#allocation2 + $0xb1] sm:$0xff]
      %v467 = vld [vmem:[#allocation2 + $0xc1] sm:$0xff]
      %v468 = vld [vmem:[#allocation2 + $0xc9] sm:$0xff]
      %v469 = vld [vmem:[#allocation2 + $0xd9] sm:$0xff]
      %v470 = vld [vmem:[#allocation2 + $0xe1] sm:$0xff]
      %v471 = vld [vmem:[#allocation2 + $0xf1] sm:$0xff]
      %v472 = vld [vmem:[#allocation2 + $0xf9] sm:$0xff]
      %v473 = vld [vmem:[#allocation2 + $0x109] sm:$0xff]
      %v474 = vld [vmem:[#allocation2 + $0x111] sm:$0xff]
      %v475 = vld [vmem:[#allocation2 + $0x121] sm:$0xff]
      %v476 = vld [vmem:[#allocation2 + $0x129] sm:$0xff]
      %v477 = vld [vmem:[#allocation2 + $0x139] sm:$0xff]
      %v478 = vld [vmem:[#allocation2 + $0x141] sm:$0xff]
      %v479 = vld [vmem:[#allocation2 + $0x151] sm:$0xff]
      %v480 = vld [vmem:[#allocation2 + $0x159] sm:$0xff]
      %v481 = vld [vmem:[#allocation2 + $0x169] sm:$0xff]
      %v482 = vld [vmem:[#allocation2 + $0x171] sm:$0xff]
      %v483 = vld [vmem:[#allocation2 + $0x2] sm:$0xff]
      %v484 = vld [vmem:[#allocation2 + $0xa] sm:$0xff]
      %v485 = vld [vmem:[#allocation2 + $0x1a] sm:$0xff]
      %v486 = vld [vmem:[#allocation2 + $0x22] sm:$0xff]
      %v487 = vld [vmem:[#allocation2 + $0x32] sm:$0xff]
      %v488 = vld [vmem:[#allocation2 + $0x3a] sm:$0xff]
      %v489 = vld [vmem:[#allocation2 + $0x4a] sm:$0xff]
      %v490 = vld [vmem:[#allocation2 + $0x52] sm:$0xff]
      %v491 = vld [vmem:[#allocation2 + $0x62] sm:$0xff]
      %v492 = vld [vmem:[#allocation2 + $0x6a] sm:$0xff]
      %v493 = vld [vmem:[#allocation2 + $0x7a] sm:$0xff]
      %v494 = vld [vmem:[#allocation2 + $0x82] sm:$0xff]
      %v495 = vld [vmem:[#allocation2 + $0x92] sm:$0xff]
      %v496 = vld [vmem:[#allocation2 + $0x9a] sm:$0xff]
      %v497 = vld [vmem:[#allocation2 + $0xaa] sm:$0xff]
      %v498 = vld [vmem:[#allocation2 + $0xb2] sm:$0xff]
      %v499 = vld [vmem:[#allocation2 + $0xc2] sm:$0xff]
      %v500 = vld [vmem:[#allocation2 + $0xca] sm:$0xff]
      %v501 = vld [vmem:[#allocation2 + $0xda] sm:$0xff]
      %v502 = vld [vmem:[#allocation2 + $0xe2] sm:$0xff]
      %v503 = vld [vmem:[#allocation2 + $0xf2] sm:$0xff]
      %v504 = vld [vmem:[#allocation2 + $0xfa] sm:$0xff]
      %v505 = vld [vmem:[#allocation2 + $0x10a] sm:$0xff]
      %v506 = vld [vmem:[#allocation2 + $0x112] sm:$0xff]
      %v507 = vld [vmem:[#allocation2 + $0x122] sm:$0xff]
      %v508 = vld [vmem:[#allocation2 + $0x12a] sm:$0xff]
      %v509 = vld [vmem:[#allocation2 + $0x13a] sm:$0xff]
      %v510 = vld [vmem:[#allocation2 + $0x142] sm:$0xff]
      %v511 = vld [vmem:[#allocation2 + $0x152] sm:$0xff]
      %v512 = vld [vmem:[#allocation2 + $0x15a] sm:$0xff]
      %v513 = vld [vmem:[#allocation2 + $0x16a] sm:$0xff]
      %v514 = vld [vmem:[#allocation2 + $0x172] sm:$0xff]
      %v515 = vld [vmem:[%s386] sm:$0xff]
      %v516 = vld [vmem:[%s386 + $0x8] sm:$0xff]
      %v517 = vld [vmem:[%s386 + $0x18] sm:$0xff]
      %v518 = vld [vmem:[%s386 + $0x20] sm:$0xff]
      %v519 = vld [vmem:[%s386 + $0x30] sm:$0xff]
      %v520 = vld [vmem:[%s386 + $0x38] sm:$0xff]
      %v521 = vld [vmem:[%s386 + $0x48] sm:$0xff]
      %v522 = vld [vmem:[%s386 + $0x50] sm:$0xff]
      %v523 = vld [vmem:[%s386 + $0x60] sm:$0xff]
      %v524 = vld [vmem:[%s386 + $0x68] sm:$0xff]
      %v525 = vld [vmem:[%s386 + $0x78] sm:$0xff]
      %v526 = vld [vmem:[%s386 + $0x80] sm:$0xff]
      %v527 = vld [vmem:[%s386 + $0x90] sm:$0xff]
      %v528 = vld [vmem:[%s386 + $0x98] sm:$0xff]
      %v529 = vld [vmem:[%s386 + $0xa8] sm:$0xff]
      %v530 = vld [vmem:[%s386 + $0xb0] sm:$0xff]
      %v531 = vld [vmem:[%s386 + $0xc0] sm:$0xff]
      %v532 = vld [vmem:[%s386 + $0xc8] sm:$0xff]
      %v533 = vld [vmem:[%s386 + $0xd8] sm:$0xff]
      %v534 = vld [vmem:[%s386 + $0xe0] sm:$0xff]
      %v535 = vld [vmem:[%s386 + $0xf0] sm:$0xff]
      %v536 = vld [vmem:[%s386 + $0xf8] sm:$0xff]
      %v537 = vld [vmem:[%s386 + $0x108] sm:$0xff]
      %v538 = vld [vmem:[%s386 + $0x110] sm:$0xff]
      %v539 = vld [vmem:[%s386 + $0x120] sm:$0xff]
      %v540 = vld [vmem:[%s386 + $0x128] sm:$0xff]
      %v541 = vld [vmem:[%s386 + $0x138] sm:$0xff]
      %v542 = vld [vmem:[%s386 + $0x140] sm:$0xff]
      %v543 = vld [vmem:[%s386 + $0x150] sm:$0xff]
      %v544 = vld [vmem:[%s386 + $0x158] sm:$0xff]
      %v545 = vld [vmem:[%s386 + $0x168] sm:$0xff]
      %v546 = vld [vmem:[%s386 + $0x170] sm:$0xff]
      %v547 = vld [vmem:[%s386 + $0x1] sm:$0xff]
      %v548 = vld [vmem:[%s386 + $0x9] sm:$0xff]
      %v549 = vld [vmem:[%s386 + $0x19] sm:$0xff]
      %v550 = vld [vmem:[%s386 + $0x21] sm:$0xff]
      %v551 = vld [vmem:[%s386 + $0x31] sm:$0xff]
      %v552 = vld [vmem:[%s386 + $0x39] sm:$0xff]
      %v553 = vld [vmem:[%s386 + $0x49] sm:$0xff]
      %v554 = vld [vmem:[%s386 + $0x51] sm:$0xff]
      %v555 = vld [vmem:[%s386 + $0x61] sm:$0xff]
      %v556 = vld [vmem:[%s386 + $0x69] sm:$0xff]
      %v557 = vld [vmem:[%s386 + $0x79] sm:$0xff]
      %v558 = vld [vmem:[%s386 + $0x81] sm:$0xff]
      %v559 = vld [vmem:[%s386 + $0x91] sm:$0xff]
      %v560 = vld [vmem:[%s386 + $0x99] sm:$0xff]
      %v561 = vld [vmem:[%s386 + $0xa9] sm:$0xff]
      %v562 = vld [vmem:[%s386 + $0xb1] sm:$0xff]
      %v563 = vld [vmem:[%s386 + $0xc1] sm:$0xff]
      %v564 = vld [vmem:[%s386 + $0xc9] sm:$0xff]
      %v565 = vld [vmem:[%s386 + $0xd9] sm:$0xff]
      %v566 = vld [vmem:[%s386 + $0xe1] sm:$0xff]
      %v567 = vld [vmem:[%s386 + $0xf1] sm:$0xff]
      %v568 = vld [vmem:[%s386 + $0xf9] sm:$0xff]
      %v569 = vld [vmem:[%s386 + $0x109] sm:$0xff]
      %v570 = vld [vmem:[%s386 + $0x111] sm:$0xff]
      %v571 = vld [vmem:[%s386 + $0x121] sm:$0xff]
      %v572 = vld [vmem:[%s386 + $0x129] sm:$0xff]
      %v573 = vld [vmem:[%s386 + $0x139] sm:$0xff]
      %v574 = vld [vmem:[%s386 + $0x141] sm:$0xff]
      %v575 = vld [vmem:[%s386 + $0x151] sm:$0xff]
      %v576 = vld [vmem:[%s386 + $0x159] sm:$0xff]
      %v577 = vld [vmem:[%s386 + $0x169] sm:$0xff]
      %v578 = vld [vmem:[%s386 + $0x171] sm:$0xff]
      %v579 = vld [vmem:[%s386 + $0x2] sm:$0xff]
      %v580 = vld [vmem:[%s386 + $0xa] sm:$0xff]
      %v581 = vld [vmem:[%s386 + $0x1a] sm:$0xff]
      %v582 = vld [vmem:[%s386 + $0x22] sm:$0xff]
      %v583 = vld [vmem:[%s386 + $0x32] sm:$0xff]
      %v584 = vld [vmem:[%s386 + $0x3a] sm:$0xff]
      %v585 = vld [vmem:[%s386 + $0x4a] sm:$0xff]
      %v586 = vld [vmem:[%s386 + $0x52] sm:$0xff]
      %v587 = vld [vmem:[%s386 + $0x62] sm:$0xff]
      %v588 = vld [vmem:[%s386 + $0x6a] sm:$0xff]
      %v589 = vld [vmem:[%s386 + $0x7a] sm:$0xff]
      %v590 = vld [vmem:[%s386 + $0x82] sm:$0xff]
      %v591 = vld [vmem:[%s386 + $0x92] sm:$0xff]
      %v592 = vld [vmem:[%s386 + $0x9a] sm:$0xff]
      %v593 = vld [vmem:[%s386 + $0xaa] sm:$0xff]
      %v594 = vld [vmem:[%s386 + $0xb2] sm:$0xff]
      %v595 = vld [vmem:[%s386 + $0xc2] sm:$0xff]
      %v596 = vld [vmem:[%s386 + $0xca] sm:$0xff]
      %v597 = vld [vmem:[%s386 + $0xda] sm:$0xff]
      %v598 = vld [vmem:[%s386 + $0xe2] sm:$0xff]
      %v599 = vld [vmem:[%s386 + $0xf2] sm:$0xff]
      %v600 = vld [vmem:[%s386 + $0xfa] sm:$0xff]
      %v601 = vld [vmem:[%s386 + $0x10a] sm:$0xff]
      %v602 = vld [vmem:[%s386 + $0x112] sm:$0xff]
      %v603 = vld [vmem:[%s386 + $0x122] sm:$0xff]
      %v604 = vld [vmem:[%s386 + $0x12a] sm:$0xff]
      %v605 = vld [vmem:[%s386 + $0x13a] sm:$0xff]
      %v606 = vld [vmem:[%s386 + $0x142] sm:$0xff]
      %v607 = vld [vmem:[%s386 + $0x152] sm:$0xff]
      %v608 = vld [vmem:[%s386 + $0x15a] sm:$0xff]
      %v609 = vld [vmem:[%s386 + $0x16a] sm:$0xff]
      %v610 = vld [vmem:[%s386 + $0x172] sm:$0xff]
      %s611 = scalar_lea.vmem [#allocation2], 48
      %v612 = vld [vmem:[%s611] sm:$0xff]
      %v613 = vld [vmem:[%s611 + $0x8] sm:$0xff]
      %v614 = vld [vmem:[%s611 + $0x18] sm:$0xff]
      %v615 = vld [vmem:[%s611 + $0x20] sm:$0xff]
      %v616 = vld [vmem:[%s611 + $0x30] sm:$0xff]
      %v617 = vld [vmem:[%s611 + $0x38] sm:$0xff]
      %v618 = vld [vmem:[%s611 + $0x48] sm:$0xff]
      %v619 = vld [vmem:[%s611 + $0x50] sm:$0xff]
      %v620 = vld [vmem:[%s611 + $0x60] sm:$0xff]
      %v621 = vld [vmem:[%s611 + $0x68] sm:$0xff]
      %v622 = vld [vmem:[%s611 + $0x78] sm:$0xff]
      %v623 = vld [vmem:[%s611 + $0x80] sm:$0xff]
      %v624 = vld [vmem:[%s611 + $0x90] sm:$0xff]
      %v625 = vld [vmem:[%s611 + $0x98] sm:$0xff]
      %v626 = vld [vmem:[%s611 + $0xa8] sm:$0xff]
      %v627 = vld [vmem:[%s611 + $0xb0] sm:$0xff]
      %v628 = vld [vmem:[%s611 + $0xc0] sm:$0xff]
      %v629 = vld [vmem:[%s611 + $0xc8] sm:$0xff]
      %v630 = vld [vmem:[%s611 + $0xd8] sm:$0xff]
      %v631 = vld [vmem:[%s611 + $0xe0] sm:$0xff]
      %v632 = vld [vmem:[%s611 + $0xf0] sm:$0xff]
      %v633 = vld [vmem:[%s611 + $0xf8] sm:$0xff]
      %v634 = vld [vmem:[%s611 + $0x108] sm:$0xff]
      %v635 = vld [vmem:[%s611 + $0x110] sm:$0xff]
      %v636 = vld [vmem:[%s611 + $0x120] sm:$0xff]
      %v637 = vld [vmem:[%s611 + $0x128] sm:$0xff]
      %v638 = vld [vmem:[%s611 + $0x138] sm:$0xff]
      %v639 = vld [vmem:[%s611 + $0x140] sm:$0xff]
      %v640 = vld [vmem:[%s611 + $0x150] sm:$0xff]
      %v641 = vld [vmem:[%s611 + $0x158] sm:$0xff]
      %v642 = vld [vmem:[%s611 + $0x168] sm:$0xff]
      %v643 = vld [vmem:[%s611 + $0x170] sm:$0xff]
      %v644 = vld [vmem:[%s611 + $0x1] sm:$0xff]
      %v645 = vld [vmem:[%s611 + $0x9] sm:$0xff]
      %v646 = vld [vmem:[%s611 + $0x19] sm:$0xff]
      %v647 = vld [vmem:[%s611 + $0x21] sm:$0xff]
      %v648 = vld [vmem:[%s611 + $0x31] sm:$0xff]
      %v649 = vld [vmem:[%s611 + $0x39] sm:$0xff]
      %v650 = vld [vmem:[%s611 + $0x49] sm:$0xff]
      %v651 = vld [vmem:[%s611 + $0x51] sm:$0xff]
      %v652 = vld [vmem:[%s611 + $0x61] sm:$0xff]
      %v653 = vld [vmem:[%s611 + $0x69] sm:$0xff]
      %v654 = vld [vmem:[%s611 + $0x79] sm:$0xff]
      %v655 = vld [vmem:[%s611 + $0x81] sm:$0xff]
      %v656 = vld [vmem:[%s611 + $0x91] sm:$0xff]
      %v657 = vld [vmem:[%s611 + $0x99] sm:$0xff]
      %v658 = vld [vmem:[%s611 + $0xa9] sm:$0xff]
      %v659 = vld [vmem:[%s611 + $0xb1] sm:$0xff]
      %v660 = vld [vmem:[%s611 + $0xc1] sm:$0xff]
      %v661 = vld [vmem:[%s611 + $0xc9] sm:$0xff]
      %v662 = vld [vmem:[%s611 + $0xd9] sm:$0xff]
      %v663 = vld [vmem:[%s611 + $0xe1] sm:$0xff]
      %v664 = vld [vmem:[%s611 + $0xf1] sm:$0xff]
      %v665 = vld [vmem:[%s611 + $0xf9] sm:$0xff]
      %v666 = vld [vmem:[%s611 + $0x109] sm:$0xff]
      %v667 = vld [vmem:[%s611 + $0x111] sm:$0xff]
      %v668 = vld [vmem:[%s611 + $0x121] sm:$0xff]
      %v669 = vld [vmem:[%s611 + $0x129] sm:$0xff]
      %v670 = vld [vmem:[%s611 + $0x139] sm:$0xff]
      %v671 = vld [vmem:[%s611 + $0x141] sm:$0xff]
      %v672 = vld [vmem:[%s611 + $0x151] sm:$0xff]
      %v673 = vld [vmem:[%s611 + $0x159] sm:$0xff]
      %v674 = vld [vmem:[%s611 + $0x169] sm:$0xff]
      %v675 = vld [vmem:[%s611 + $0x171] sm:$0xff]
      %v676 = vld [vmem:[%s611 + $0x2] sm:$0xff]
      %v677 = vld [vmem:[%s611 + $0xa] sm:$0xff]
      %v678 = vld [vmem:[%s611 + $0x1a] sm:$0xff]
      %v679 = vld [vmem:[%s611 + $0x22] sm:$0xff]
      %v680 = vld [vmem:[%s611 + $0x32] sm:$0xff]
      %v681 = vld [vmem:[%s611 + $0x3a] sm:$0xff]
      %v682 = vld [vmem:[%s611 + $0x4a] sm:$0xff]
      %v683 = vld [vmem:[%s611 + $0x52] sm:$0xff]
      %v684 = vld [vmem:[%s611 + $0x62] sm:$0xff]
      %v685 = vld [vmem:[%s611 + $0x6a] sm:$0xff]
      %v686 = vld [vmem:[%s611 + $0x7a] sm:$0xff]
      %v687 = vld [vmem:[%s611 + $0x82] sm:$0xff]
      %v688 = vld [vmem:[%s611 + $0x92] sm:$0xff]
      %v689 = vld [vmem:[%s611 + $0x9a] sm:$0xff]
      %v690 = vld [vmem:[%s611 + $0xaa] sm:$0xff]
      %v691 = vld [vmem:[%s611 + $0xb2] sm:$0xff]
      %v692 = vld [vmem:[%s611 + $0xc2] sm:$0xff]
      %v693 = vld [vmem:[%s611 + $0xca] sm:$0xff]
      %v694 = vld [vmem:[%s611 + $0xda] sm:$0xff]
      %v695 = vld [vmem:[%s611 + $0xe2] sm:$0xff]
      %v696 = vld [vmem:[%s611 + $0xf2] sm:$0xff]
      %v697 = vld [vmem:[%s611 + $0xfa] sm:$0xff]
      %v698 = vld [vmem:[%s611 + $0x10a] sm:$0xff]
      %v699 = vld [vmem:[%s611 + $0x112] sm:$0xff]
      %v700 = vld [vmem:[%s611 + $0x122] sm:$0xff]
      %v701 = vld [vmem:[%s611 + $0x12a] sm:$0xff]
      %v702 = vld [vmem:[%s611 + $0x13a] sm:$0xff]
      %v703 = vld [vmem:[%s611 + $0x142] sm:$0xff]
      %v704 = vld [vmem:[%s611 + $0x152] sm:$0xff]
      %v705 = vld [vmem:[%s611 + $0x15a] sm:$0xff]
      %v706 = vld [vmem:[%s611 + $0x16a] sm:$0xff]
      %v707 = vld [vmem:[%s611 + $0x172] sm:$0xff]
      %740 = vrot.lane.b32.xlu0 %v451, 4
      %v741 = vpop.permute.xlu0 %740
      %742 = vrot.lane.b32.xlu0 %v452, 4
      %v743 = vpop.permute.xlu0 %742
      %744 = vrot.lane.b32.xlu0 %v453, 4
      %v745 = vpop.permute.xlu0 %744
      %746 = vrot.lane.b32.xlu0 %v454, 4
      %v747 = vpop.permute.xlu0 %746
      %748 = vrot.lane.b32.xlu0 %v455, 4
      %v749 = vpop.permute.xlu0 %748
      %750 = vrot.lane.b32.xlu0 %v456, 4
      %v751 = vpop.permute.xlu0 %750
      %752 = vrot.lane.b32.xlu0 %v457, 4
      %v753 = vpop.permute.xlu0 %752
      %754 = vrot.lane.b32.xlu0 %v458, 4
      %v755 = vpop.permute.xlu0 %754
      %756 = vrot.lane.b32.xlu0 %v459, 4
      %v757 = vpop.permute.xlu0 %756
      %758 = vrot.lane.b32.xlu0 %v460, 4
      %v759 = vpop.permute.xlu0 %758
      %760 = vrot.lane.b32.xlu0 %v461, 4
      %v761 = vpop.permute.xlu0 %760
      %762 = vrot.lane.b32.xlu0 %v462, 4
      %v763 = vpop.permute.xlu0 %762
      %764 = vrot.lane.b32.xlu0 %v463, 4
      %v765 = vpop.permute.xlu0 %764
      %766 = vrot.lane.b32.xlu0 %v464, 4
      %v767 = vpop.permute.xlu0 %766
      %768 = vrot.lane.b32.xlu0 %v465, 4
      %v769 = vpop.permute.xlu0 %768
      %770 = vrot.lane.b32.xlu0 %v466, 4
      %v771 = vpop.permute.xlu0 %770
      %772 = vrot.lane.b32.xlu0 %v467, 4
      %v773 = vpop.permute.xlu0 %772
      %774 = vrot.lane.b32.xlu0 %v468, 4
      %v775 = vpop.permute.xlu0 %774
      %776 = vrot.lane.b32.xlu0 %v469, 4
      %v777 = vpop.permute.xlu0 %776
      %778 = vrot.lane.b32.xlu0 %v470, 4
      %v779 = vpop.permute.xlu0 %778
      %780 = vrot.lane.b32.xlu0 %v471, 4
      %v781 = vpop.permute.xlu0 %780
      %782 = vrot.lane.b32.xlu0 %v472, 4
      %v783 = vpop.permute.xlu0 %782
      %784 = vrot.lane.b32.xlu0 %v473, 4
      %v785 = vpop.permute.xlu0 %784
      %786 = vrot.lane.b32.xlu0 %v474, 4
      %v787 = vpop.permute.xlu0 %786
      %788 = vrot.lane.b32.xlu0 %v475, 4
      %v789 = vpop.permute.xlu0 %788
      %790 = vrot.lane.b32.xlu0 %v476, 4
      %v791 = vpop.permute.xlu0 %790
      %792 = vrot.lane.b32.xlu0 %v477, 4
      %v793 = vpop.permute.xlu0 %792
      %794 = vrot.lane.b32.xlu0 %v478, 4
      %v795 = vpop.permute.xlu0 %794
      %796 = vrot.lane.b32.xlu0 %v479, 4
      %v797 = vpop.permute.xlu0 %796
      %798 = vrot.lane.b32.xlu0 %v480, 4
      %v799 = vpop.permute.xlu0 %798
      %800 = vrot.lane.b32.xlu0 %v481, 4
      %v801 = vpop.permute.xlu0 %800
      %802 = vrot.lane.b32.xlu0 %v482, 4
      %v803 = vpop.permute.xlu0 %802
      %868 = vrot.lane.b32.xlu0 %v483, 8
      %v869 = vpop.permute.xlu0 %868
      %870 = vrot.lane.b32.xlu0 %v484, 8
      %v871 = vpop.permute.xlu0 %870
      %872 = vrot.lane.b32.xlu0 %v485, 8
      %v873 = vpop.permute.xlu0 %872
      %874 = vrot.lane.b32.xlu0 %v486, 8
      %v875 = vpop.permute.xlu0 %874
      %876 = vrot.lane.b32.xlu0 %v487, 8
      %v877 = vpop.permute.xlu0 %876
      %878 = vrot.lane.b32.xlu0 %v488, 8
      %v879 = vpop.permute.xlu0 %878
      %880 = vrot.lane.b32.xlu0 %v489, 8
      %v881 = vpop.permute.xlu0 %880
      %882 = vrot.lane.b32.xlu0 %v490, 8
      %v883 = vpop.permute.xlu0 %882
      %884 = vrot.lane.b32.xlu0 %v491, 8
      %v885 = vpop.permute.xlu0 %884
      %886 = vrot.lane.b32.xlu0 %v492, 8
      %v887 = vpop.permute.xlu0 %886
      %888 = vrot.lane.b32.xlu0 %v493, 8
      %v889 = vpop.permute.xlu0 %888
      %890 = vrot.lane.b32.xlu0 %v494, 8
      %v891 = vpop.permute.xlu0 %890
      %892 = vrot.lane.b32.xlu0 %v495, 8
      %v893 = vpop.permute.xlu0 %892
      %894 = vrot.lane.b32.xlu0 %v496, 8
      %v895 = vpop.permute.xlu0 %894
      %896 = vrot.lane.b32.xlu0 %v497, 8
      %v897 = vpop.permute.xlu0 %896
      %898 = vrot.lane.b32.xlu0 %v498, 8
      %v899 = vpop.permute.xlu0 %898
      %900 = vrot.lane.b32.xlu0 %v499, 8
      %v901 = vpop.permute.xlu0 %900
      %902 = vrot.lane.b32.xlu0 %v500, 8
      %v903 = vpop.permute.xlu0 %902
      %904 = vrot.lane.b32.xlu0 %v501, 8
      %v905 = vpop.permute.xlu0 %904
      %906 = vrot.lane.b32.xlu0 %v502, 8
      %v907 = vpop.permute.xlu0 %906
      %908 = vrot.lane.b32.xlu0 %v503, 8
      %v909 = vpop.permute.xlu0 %908
      %910 = vrot.lane.b32.xlu0 %v504, 8
      %v911 = vpop.permute.xlu0 %910
      %912 = vrot.lane.b32.xlu0 %v505, 8
      %v913 = vpop.permute.xlu0 %912
      %914 = vrot.lane.b32.xlu0 %v506, 8
      %v915 = vpop.permute.xlu0 %914
      %916 = vrot.lane.b32.xlu0 %v507, 8
      %v917 = vpop.permute.xlu0 %916
      %918 = vrot.lane.b32.xlu0 %v508, 8
      %v919 = vpop.permute.xlu0 %918
      %920 = vrot.lane.b32.xlu0 %v509, 8
      %v921 = vpop.permute.xlu0 %920
      %922 = vrot.lane.b32.xlu0 %v510, 8
      %v923 = vpop.permute.xlu0 %922
      %924 = vrot.lane.b32.xlu0 %v511, 8
      %v925 = vpop.permute.xlu0 %924
      %926 = vrot.lane.b32.xlu0 %v512, 8
      %v927 = vpop.permute.xlu0 %926
      %928 = vrot.lane.b32.xlu0 %v513, 8
      %v929 = vpop.permute.xlu0 %928
      %930 = vrot.lane.b32.xlu0 %v514, 8
      %v931 = vpop.permute.xlu0 %930
      %996 = vrot.lane.b32.xlu0 %v515, 12
      %v997 = vpop.permute.xlu0 %996
      %998 = vrot.lane.b32.xlu0 %v516, 12
      %v999 = vpop.permute.xlu0 %998
      %1000 = vrot.lane.b32.xlu0 %v517, 12
      %v1001 = vpop.permute.xlu0 %1000
      %1002 = vrot.lane.b32.xlu0 %v518, 12
      %v1003 = vpop.permute.xlu0 %1002
      %1004 = vrot.lane.b32.xlu0 %v519, 12
      %v1005 = vpop.permute.xlu0 %1004
      %1006 = vrot.lane.b32.xlu0 %v520, 12
      %v1007 = vpop.permute.xlu0 %1006
      %1008 = vrot.lane.b32.xlu0 %v521, 12
      %v1009 = vpop.permute.xlu0 %1008
      %1010 = vrot.lane.b32.xlu0 %v522, 12
      %v1011 = vpop.permute.xlu0 %1010
      %1012 = vrot.lane.b32.xlu0 %v523, 12
      %v1013 = vpop.permute.xlu0 %1012
      %1014 = vrot.lane.b32.xlu0 %v524, 12
      %v1015 = vpop.permute.xlu0 %1014
      %1016 = vrot.lane.b32.xlu0 %v525, 12
      %v1017 = vpop.permute.xlu0 %1016
      %1018 = vrot.lane.b32.xlu0 %v526, 12
      %v1019 = vpop.permute.xlu0 %1018
      %1020 = vrot.lane.b32.xlu0 %v527, 12
      %v1021 = vpop.permute.xlu0 %1020
      %1022 = vrot.lane.b32.xlu0 %v528, 12
      %v1023 = vpop.permute.xlu0 %1022
      %1024 = vrot.lane.b32.xlu0 %v529, 12
      %v1025 = vpop.permute.xlu0 %1024
      %1026 = vrot.lane.b32.xlu0 %v530, 12
      %v1027 = vpop.permute.xlu0 %1026
      %1028 = vrot.lane.b32.xlu0 %v531, 12
      %v1029 = vpop.permute.xlu0 %1028
      %1030 = vrot.lane.b32.xlu0 %v532, 12
      %v1031 = vpop.permute.xlu0 %1030
      %1032 = vrot.lane.b32.xlu0 %v533, 12
      %v1033 = vpop.permute.xlu0 %1032
      %1034 = vrot.lane.b32.xlu0 %v534, 12
      %v1035 = vpop.permute.xlu0 %1034
      %1036 = vrot.lane.b32.xlu0 %v535, 12
      %v1037 = vpop.permute.xlu0 %1036
      %1038 = vrot.lane.b32.xlu0 %v536, 12
      %v1039 = vpop.permute.xlu0 %1038
      %1040 = vrot.lane.b32.xlu0 %v537, 12
      %v1041 = vpop.permute.xlu0 %1040
      %1042 = vrot.lane.b32.xlu0 %v538, 12
      %v1043 = vpop.permute.xlu0 %1042
      %1044 = vrot.lane.b32.xlu0 %v539, 12
      %v1045 = vpop.permute.xlu0 %1044
      %1046 = vrot.lane.b32.xlu0 %v540, 12
      %v1047 = vpop.permute.xlu0 %1046
      %1048 = vrot.lane.b32.xlu0 %v541, 12
      %v1049 = vpop.permute.xlu0 %1048
      %1050 = vrot.lane.b32.xlu0 %v542, 12
      %v1051 = vpop.permute.xlu0 %1050
      %1052 = vrot.lane.b32.xlu0 %v543, 12
      %v1053 = vpop.permute.xlu0 %1052
      %1054 = vrot.lane.b32.xlu0 %v544, 12
      %v1055 = vpop.permute.xlu0 %1054
      %1056 = vrot.lane.b32.xlu0 %v545, 12
      %v1057 = vpop.permute.xlu0 %1056
      %1058 = vrot.lane.b32.xlu0 %v546, 12
      %v1059 = vpop.permute.xlu0 %1058
      %1124 = vrot.lane.b32.xlu0 %v547, 16
      %v1125 = vpop.permute.xlu0 %1124
      %1126 = vrot.lane.b32.xlu0 %v548, 16
      %v1127 = vpop.permute.xlu0 %1126
      %1128 = vrot.lane.b32.xlu0 %v549, 16
      %v1129 = vpop.permute.xlu0 %1128
      %1130 = vrot.lane.b32.xlu0 %v550, 16
      %v1131 = vpop.permute.xlu0 %1130
      %1132 = vrot.lane.b32.xlu0 %v551, 16
      %v1133 = vpop.permute.xlu0 %1132
      %1134 = vrot.lane.b32.xlu0 %v552, 16
      %v1135 = vpop.permute.xlu0 %1134
      %1136 = vrot.lane.b32.xlu0 %v553, 16
      %v1137 = vpop.permute.xlu0 %1136
      %1138 = vrot.lane.b32.xlu0 %v554, 16
      %v1139 = vpop.permute.xlu0 %1138
      %1140 = vrot.lane.b32.xlu0 %v555, 16
      %v1141 = vpop.permute.xlu0 %1140
      %1142 = vrot.lane.b32.xlu0 %v556, 16
      %v1143 = vpop.permute.xlu0 %1142
      %1144 = vrot.lane.b32.xlu0 %v557, 16
      %v1145 = vpop.permute.xlu0 %1144
      %1146 = vrot.lane.b32.xlu0 %v558, 16
      %v1147 = vpop.permute.xlu0 %1146
      %1148 = vrot.lane.b32.xlu0 %v559, 16
      %v1149 = vpop.permute.xlu0 %1148
      %1150 = vrot.lane.b32.xlu0 %v560, 16
      %v1151 = vpop.permute.xlu0 %1150
      %1152 = vrot.lane.b32.xlu0 %v561, 16
      %v1153 = vpop.permute.xlu0 %1152
      %1154 = vrot.lane.b32.xlu0 %v562, 16
      %v1155 = vpop.permute.xlu0 %1154
      %1156 = vrot.lane.b32.xlu0 %v563, 16
      %v1157 = vpop.permute.xlu0 %1156
      %1158 = vrot.lane.b32.xlu0 %v564, 16
      %v1159 = vpop.permute.xlu0 %1158
      %1160 = vrot.lane.b32.xlu0 %v565, 16
      %v1161 = vpop.permute.xlu0 %1160
      %1162 = vrot.lane.b32.xlu0 %v566, 16
      %v1163 = vpop.permute.xlu0 %1162
      %1164 = vrot.lane.b32.xlu0 %v567, 16
      %v1165 = vpop.permute.xlu0 %1164
      %1166 = vrot.lane.b32.xlu0 %v568, 16
      %v1167 = vpop.permute.xlu0 %1166
      %1168 = vrot.lane.b32.xlu0 %v569, 16
      %v1169 = vpop.permute.xlu0 %1168
      %1170 = vrot.lane.b32.xlu0 %v570, 16
      %v1171 = vpop.permute.xlu0 %1170
      %1172 = vrot.lane.b32.xlu0 %v571, 16
      %v1173 = vpop.permute.xlu0 %1172
      %1174 = vrot.lane.b32.xlu0 %v572, 16
      %v1175 = vpop.permute.xlu0 %1174
      %1176 = vrot.lane.b32.xlu0 %v573, 16
      %v1177 = vpop.permute.xlu0 %1176
      %1178 = vrot.lane.b32.xlu0 %v574, 16
      %v1179 = vpop.permute.xlu0 %1178
      %1180 = vrot.lane.b32.xlu0 %v575, 16
      %v1181 = vpop.permute.xlu0 %1180
      %1182 = vrot.lane.b32.xlu0 %v576, 16
      %v1183 = vpop.permute.xlu0 %1182
      %1184 = vrot.lane.b32.xlu0 %v577, 16
      %v1185 = vpop.permute.xlu0 %1184
      %1186 = vrot.lane.b32.xlu0 %v578, 16
      %v1187 = vpop.permute.xlu0 %1186
      %1252 = vrot.lane.b32.xlu0 %v579, 20
      %v1253 = vpop.permute.xlu0 %1252
      %1254 = vrot.lane.b32.xlu0 %v580, 20
      %v1255 = vpop.permute.xlu0 %1254
      %1256 = vrot.lane.b32.xlu0 %v581, 20
      %v1257 = vpop.permute.xlu0 %1256
      %1258 = vrot.lane.b32.xlu0 %v582, 20
      %v1259 = vpop.permute.xlu0 %1258
      %1260 = vrot.lane.b32.xlu0 %v583, 20
      %v1261 = vpop.permute.xlu0 %1260
      %1262 = vrot.lane.b32.xlu0 %v584, 20
      %v1263 = vpop.permute.xlu0 %1262
      %1264 = vrot.lane.b32.xlu0 %v585, 20
      %v1265 = vpop.permute.xlu0 %1264
      %1266 = vrot.lane.b32.xlu0 %v586, 20
      %v1267 = vpop.permute.xlu0 %1266
      %1268 = vrot.lane.b32.xlu0 %v587, 20
      %v1269 = vpop.permute.xlu0 %1268
      %1270 = vrot.lane.b32.xlu0 %v588, 20
      %v1271 = vpop.permute.xlu0 %1270
      %1272 = vrot.lane.b32.xlu0 %v589, 20
      %v1273 = vpop.permute.xlu0 %1272
      %1274 = vrot.lane.b32.xlu0 %v590, 20
      %v1275 = vpop.permute.xlu0 %1274
      %1276 = vrot.lane.b32.xlu0 %v591, 20
      %v1277 = vpop.permute.xlu0 %1276
      %1278 = vrot.lane.b32.xlu0 %v592, 20
      %v1279 = vpop.permute.xlu0 %1278
      %1280 = vrot.lane.b32.xlu0 %v593, 20
      %v1281 = vpop.permute.xlu0 %1280
      %1282 = vrot.lane.b32.xlu0 %v594, 20
      %v1283 = vpop.permute.xlu0 %1282
      %1284 = vrot.lane.b32.xlu0 %v595, 20
      %v1285 = vpop.permute.xlu0 %1284
      %1286 = vrot.lane.b32.xlu0 %v596, 20
      %v1287 = vpop.permute.xlu0 %1286
      %1288 = vrot.lane.b32.xlu0 %v597, 20
      %v1289 = vpop.permute.xlu0 %1288
      %1290 = vrot.lane.b32.xlu0 %v598, 20
      %v1291 = vpop.permute.xlu0 %1290
      %1292 = vrot.lane.b32.xlu0 %v599, 20
      %v1293 = vpop.permute.xlu0 %1292
      %1294 = vrot.lane.b32.xlu0 %v600, 20
      %v1295 = vpop.permute.xlu0 %1294
      %1296 = vrot.lane.b32.xlu0 %v601, 20
      %v1297 = vpop.permute.xlu0 %1296
      %1298 = vrot.lane.b32.xlu0 %v602, 20
      %v1299 = vpop.permute.xlu0 %1298
      %1300 = vrot.lane.b32.xlu0 %v603, 20
      %v1301 = vpop.permute.xlu0 %1300
      %1302 = vrot.lane.b32.xlu0 %v604, 20
      %v1303 = vpop.permute.xlu0 %1302
      %1304 = vrot.lane.b32.xlu0 %v605, 20
      %v1305 = vpop.permute.xlu0 %1304
      %1306 = vrot.lane.b32.xlu0 %v606, 20
      %v1307 = vpop.permute.xlu0 %1306
      %1308 = vrot.lane.b32.xlu0 %v607, 20
      %v1309 = vpop.permute.xlu0 %1308
      %1310 = vrot.lane.b32.xlu0 %v608, 20
      %v1311 = vpop.permute.xlu0 %1310
      %1312 = vrot.lane.b32.xlu0 %v609, 20
      %v1313 = vpop.permute.xlu0 %1312
      %1314 = vrot.lane.b32.xlu0 %v610, 20
      %v1315 = vpop.permute.xlu0 %1314
      %1380 = vrot.lane.b32.xlu0 %v612, 24
      %v1381 = vpop.permute.xlu0 %1380
      %1382 = vrot.lane.b32.xlu0 %v613, 24
      %v1383 = vpop.permute.xlu0 %1382
      %1384 = vrot.lane.b32.xlu0 %v614, 24
      %v1385 = vpop.permute.xlu0 %1384
      %1386 = vrot.lane.b32.xlu0 %v615, 24
      %v1387 = vpop.permute.xlu0 %1386
      %1388 = vrot.lane.b32.xlu0 %v616, 24
      %v1389 = vpop.permute.xlu0 %1388
      %1390 = vrot.lane.b32.xlu0 %v617, 24
      %v1391 = vpop.permute.xlu0 %1390
      %1392 = vrot.lane.b32.xlu0 %v618, 24
      %v1393 = vpop.permute.xlu0 %1392
      %1394 = vrot.lane.b32.xlu0 %v619, 24
      %v1395 = vpop.permute.xlu0 %1394
      %1396 = vrot.lane.b32.xlu0 %v620, 24
      %v1397 = vpop.permute.xlu0 %1396
      %1398 = vrot.lane.b32.xlu0 %v621, 24
      %v1399 = vpop.permute.xlu0 %1398
      %1400 = vrot.lane.b32.xlu0 %v622, 24
      %v1401 = vpop.permute.xlu0 %1400
      %1402 = vrot.lane.b32.xlu0 %v623, 24
      %v1403 = vpop.permute.xlu0 %1402
      %1404 = vrot.lane.b32.xlu0 %v624, 24
      %v1405 = vpop.permute.xlu0 %1404
      %1406 = vrot.lane.b32.xlu0 %v625, 24
      %v1407 = vpop.permute.xlu0 %1406
      %1408 = vrot.lane.b32.xlu0 %v626, 24
      %v1409 = vpop.permute.xlu0 %1408
      %1410 = vrot.lane.b32.xlu0 %v627, 24
      %v1411 = vpop.permute.xlu0 %1410
      %1412 = vrot.lane.b32.xlu0 %v628, 24
      %v1413 = vpop.permute.xlu0 %1412
      %1414 = vrot.lane.b32.xlu0 %v629, 24
      %v1415 = vpop.permute.xlu0 %1414
      %1416 = vrot.lane.b32.xlu0 %v630, 24
      %v1417 = vpop.permute.xlu0 %1416
      %1418 = vrot.lane.b32.xlu0 %v631, 24
      %v1419 = vpop.permute.xlu0 %1418
      %1420 = vrot.lane.b32.xlu0 %v632, 24
      %v1421 = vpop.permute.xlu0 %1420
      %1422 = vrot.lane.b32.xlu0 %v633, 24
      %v1423 = vpop.permute.xlu0 %1422
      %1424 = vrot.lane.b32.xlu0 %v634, 24
      %v1425 = vpop.permute.xlu0 %1424
      %1426 = vrot.lane.b32.xlu0 %v635, 24
      %v1427 = vpop.permute.xlu0 %1426
      %1428 = vrot.lane.b32.xlu0 %v636, 24
      %v1429 = vpop.permute.xlu0 %1428
      %1430 = vrot.lane.b32.xlu0 %v637, 24
      %v1431 = vpop.permute.xlu0 %1430
      %1432 = vrot.lane.b32.xlu0 %v638, 24
      %v1433 = vpop.permute.xlu0 %1432
      %1434 = vrot.lane.b32.xlu0 %v639, 24
      %v1435 = vpop.permute.xlu0 %1434
      %1436 = vrot.lane.b32.xlu0 %v640, 24
      %v1437 = vpop.permute.xlu0 %1436
      %1438 = vrot.lane.b32.xlu0 %v641, 24
      %v1439 = vpop.permute.xlu0 %1438
      %1440 = vrot.lane.b32.xlu0 %v642, 24
      %v1441 = vpop.permute.xlu0 %1440
      %1442 = vrot.lane.b32.xlu0 %v643, 24
      %v1443 = vpop.permute.xlu0 %1442
      %1508 = vrot.lane.b32.xlu0 %v644, 28
      %v1509 = vpop.permute.xlu0 %1508
      %1510 = vrot.lane.b32.xlu0 %v645, 28
      %v1511 = vpop.permute.xlu0 %1510
      %1512 = vrot.lane.b32.xlu0 %v646, 28
      %v1513 = vpop.permute.xlu0 %1512
      %1514 = vrot.lane.b32.xlu0 %v647, 28
      %v1515 = vpop.permute.xlu0 %1514
      %1516 = vrot.lane.b32.xlu0 %v648, 28
      %v1517 = vpop.permute.xlu0 %1516
      %1518 = vrot.lane.b32.xlu0 %v649, 28
      %v1519 = vpop.permute.xlu0 %1518
      %1520 = vrot.lane.b32.xlu0 %v650, 28
      %v1521 = vpop.permute.xlu0 %1520
      %1522 = vrot.lane.b32.xlu0 %v651, 28
      %v1523 = vpop.permute.xlu0 %1522
      %1524 = vrot.lane.b32.xlu0 %v652, 28
      %v1525 = vpop.permute.xlu0 %1524
      %1526 = vrot.lane.b32.xlu0 %v653, 28
      %v1527 = vpop.permute.xlu0 %1526
      %1528 = vrot.lane.b32.xlu0 %v654, 28
      %v1529 = vpop.permute.xlu0 %1528
      %1530 = vrot.lane.b32.xlu0 %v655, 28
      %v1531 = vpop.permute.xlu0 %1530
      %1532 = vrot.lane.b32.xlu0 %v656, 28
      %v1533 = vpop.permute.xlu0 %1532
      %1534 = vrot.lane.b32.xlu0 %v657, 28
      %v1535 = vpop.permute.xlu0 %1534
      %1536 = vrot.lane.b32.xlu0 %v658, 28
      %v1537 = vpop.permute.xlu0 %1536
      %1538 = vrot.lane.b32.xlu0 %v659, 28
      %v1539 = vpop.permute.xlu0 %1538
      %1540 = vrot.lane.b32.xlu0 %v660, 28
      %v1541 = vpop.permute.xlu0 %1540
      %1542 = vrot.lane.b32.xlu0 %v661, 28
      %v1543 = vpop.permute.xlu0 %1542
      %1544 = vrot.lane.b32.xlu0 %v662, 28
      %v1545 = vpop.permute.xlu0 %1544
      %1546 = vrot.lane.b32.xlu0 %v663, 28
      %v1547 = vpop.permute.xlu0 %1546
      %1548 = vrot.lane.b32.xlu0 %v664, 28
      %v1549 = vpop.permute.xlu0 %1548
      %1550 = vrot.lane.b32.xlu0 %v665, 28
      %v1551 = vpop.permute.xlu0 %1550
      %1552 = vrot.lane.b32.xlu0 %v666, 28
      %v1553 = vpop.permute.xlu0 %1552
      %1554 = vrot.lane.b32.xlu0 %v667, 28
      %v1555 = vpop.permute.xlu0 %1554
      %1556 = vrot.lane.b32.xlu0 %v668, 28
      %v1557 = vpop.permute.xlu0 %1556
      %1558 = vrot.lane.b32.xlu0 %v669, 28
      %v1559 = vpop.permute.xlu0 %1558
      %1560 = vrot.lane.b32.xlu0 %v670, 28
      %v1561 = vpop.permute.xlu0 %1560
      %1562 = vrot.lane.b32.xlu0 %v671, 28
      %v1563 = vpop.permute.xlu0 %1562
      %1564 = vrot.lane.b32.xlu0 %v672, 28
      %v1565 = vpop.permute.xlu0 %1564
      %1566 = vrot.lane.b32.xlu0 %v673, 28
      %v1567 = vpop.permute.xlu0 %1566
      %1568 = vrot.lane.b32.xlu0 %v674, 28
      %v1569 = vpop.permute.xlu0 %1568
      %1570 = vrot.lane.b32.xlu0 %v675, 28
      %v1571 = vpop.permute.xlu0 %1570
      %1636 = vrot.lane.b32.xlu0 %v676, 32
      %v1637 = vpop.permute.xlu0 %1636
      %1638 = vrot.lane.b32.xlu0 %v677, 32
      %v1639 = vpop.permute.xlu0 %1638
      %1640 = vrot.lane.b32.xlu0 %v678, 32
      %v1641 = vpop.permute.xlu0 %1640
      %1642 = vrot.lane.b32.xlu0 %v679, 32
      %v1643 = vpop.permute.xlu0 %1642
      %1644 = vrot.lane.b32.xlu0 %v680, 32
      %v1645 = vpop.permute.xlu0 %1644
      %1646 = vrot.lane.b32.xlu0 %v681, 32
      %v1647 = vpop.permute.xlu0 %1646
      %1648 = vrot.lane.b32.xlu0 %v682, 32
      %v1649 = vpop.permute.xlu0 %1648
      %1650 = vrot.lane.b32.xlu0 %v683, 32
      %v1651 = vpop.permute.xlu0 %1650
      %1652 = vrot.lane.b32.xlu0 %v684, 32
      %v1653 = vpop.permute.xlu0 %1652
      %1654 = vrot.lane.b32.xlu0 %v685, 32
      %v1655 = vpop.permute.xlu0 %1654
      %1656 = vrot.lane.b32.xlu0 %v686, 32
      %v1657 = vpop.permute.xlu0 %1656
      %1658 = vrot.lane.b32.xlu0 %v687, 32
      %v1659 = vpop.permute.xlu0 %1658
      %1660 = vrot.lane.b32.xlu0 %v688, 32
      %v1661 = vpop.permute.xlu0 %1660
      %1662 = vrot.lane.b32.xlu0 %v689, 32
      %v1663 = vpop.permute.xlu0 %1662
      %1664 = vrot.lane.b32.xlu0 %v690, 32
      %v1665 = vpop.permute.xlu0 %1664
      %1666 = vrot.lane.b32.xlu0 %v691, 32
      %v1667 = vpop.permute.xlu0 %1666
      %1668 = vrot.lane.b32.xlu0 %v692, 32
      %v1669 = vpop.permute.xlu0 %1668
      %1670 = vrot.lane.b32.xlu0 %v693, 32
      %v1671 = vpop.permute.xlu0 %1670
      %1672 = vrot.lane.b32.xlu0 %v694, 32
      %v1673 = vpop.permute.xlu0 %1672
      %1674 = vrot.lane.b32.xlu0 %v695, 32
      %v1675 = vpop.permute.xlu0 %1674
      %1676 = vrot.lane.b32.xlu0 %v696, 32
      %v1677 = vpop.permute.xlu0 %1676
      %1678 = vrot.lane.b32.xlu0 %v697, 32
      %v1679 = vpop.permute.xlu0 %1678
      %1680 = vrot.lane.b32.xlu0 %v698, 32
      %v1681 = vpop.permute.xlu0 %1680
      %1682 = vrot.lane.b32.xlu0 %v699, 32
      %v1683 = vpop.permute.xlu0 %1682
      %1684 = vrot.lane.b32.xlu0 %v700, 32
      %v1685 = vpop.permute.xlu0 %1684
      %1686 = vrot.lane.b32.xlu0 %v701, 32
      %v1687 = vpop.permute.xlu0 %1686
      %1688 = vrot.lane.b32.xlu0 %v702, 32
      %v1689 = vpop.permute.xlu0 %1688
      %1690 = vrot.lane.b32.xlu0 %v703, 32
      %v1691 = vpop.permute.xlu0 %1690
      %1692 = vrot.lane.b32.xlu0 %v704, 32
      %v1693 = vpop.permute.xlu0 %1692
      %1694 = vrot.lane.b32.xlu0 %v705, 32
      %v1695 = vpop.permute.xlu0 %1694
      %1696 = vrot.lane.b32.xlu0 %v706, 32
      %v1697 = vpop.permute.xlu0 %1696
      %1698 = vrot.lane.b32.xlu0 %v707, 32
      %v1699 = vpop.permute.xlu0 %1698
      %v1732 = vsel %vm340, %v419, %v741
      %v1733 = vsel %vm340, %v420, %v743
      %v1734 = vsel %vm340, %v421, %v745
      %v1735 = vsel %vm340, %v422, %v747
      %v1736 = vsel %vm340, %v423, %v749
      %v1737 = vsel %vm340, %v424, %v751
      %v1738 = vsel %vm340, %v425, %v753
      %v1739 = vsel %vm340, %v426, %v755
      %v1740 = vsel %vm340, %v427, %v757
      %v1741 = vsel %vm340, %v428, %v759
      %v1742 = vsel %vm340, %v429, %v761
      %v1743 = vsel %vm340, %v430, %v763
      %v1744 = vsel %vm340, %v431, %v765
      %v1745 = vsel %vm340, %v432, %v767
      %v1746 = vsel %vm340, %v433, %v769
      %v1747 = vsel %vm340, %v434, %v771
      %v1748 = vsel %vm340, %v435, %v773
      %v1749 = vsel %vm340, %v436, %v775
      %v1750 = vsel %vm340, %v437, %v777
      %v1751 = vsel %vm340, %v438, %v779
      %v1752 = vsel %vm340, %v439, %v781
      %v1753 = vsel %vm340, %v440, %v783
      %v1754 = vsel %vm340, %v441, %v785
      %v1755 = vsel %vm340, %v442, %v787
      %v1756 = vsel %vm340, %v443, %v789
      %v1757 = vsel %vm340, %v444, %v791
      %v1758 = vsel %vm340, %v445, %v793
      %v1759 = vsel %vm340, %v446, %v795
      %v1760 = vsel %vm340, %v447, %v797
      %v1761 = vsel %vm340, %v448, %v799
      %v1762 = vsel %vm340, %v449, %v801
      %v1763 = vsel %vm340, %v450, %v803
      %vm1764 = vcmask 64512
      %v1765 = vsel %vm1764, %v1732, %v869
      %v1766 = vsel %vm1764, %v1733, %v871
      %v1767 = vsel %vm1764, %v1734, %v873
      %v1768 = vsel %vm1764, %v1735, %v875
      %v1769 = vsel %vm1764, %v1736, %v877
      %v1770 = vsel %vm1764, %v1737, %v879
      %v1771 = vsel %vm1764, %v1738, %v881
      %v1772 = vsel %vm1764, %v1739, %v883
      %v1773 = vsel %vm1764, %v1740, %v885
      %v1774 = vsel %vm1764, %v1741, %v887
      %v1775 = vsel %vm1764, %v1742, %v889
      %v1776 = vsel %vm1764, %v1743, %v891
      %v1777 = vsel %vm1764, %v1744, %v893
      %v1778 = vsel %vm1764, %v1745, %v895
      %v1779 = vsel %vm1764, %v1746, %v897
      %v1780 = vsel %vm1764, %v1747, %v899
      %v1781 = vsel %vm1764, %v1748, %v901
      %v1782 = vsel %vm1764, %v1749, %v903
      %v1783 = vsel %vm1764, %v1750, %v905
      %v1784 = vsel %vm1764, %v1751, %v907
      %v1785 = vsel %vm1764, %v1752, %v909
      %v1786 = vsel %vm1764, %v1753, %v911
      %v1787 = vsel %vm1764, %v1754, %v913
      %v1788 = vsel %vm1764, %v1755, %v915
      %v1789 = vsel %vm1764, %v1756, %v917
      %v1790 = vsel %vm1764, %v1757, %v919
      %v1791 = vsel %vm1764, %v1758, %v921
      %v1792 = vsel %vm1764, %v1759, %v923
      %v1793 = vsel %vm1764, %v1760, %v925
      %v1794 = vsel %vm1764, %v1761, %v927
      %v1795 = vsel %vm1764, %v1762, %v929
      %v1796 = vsel %vm1764, %v1763, %v931
      %vm1797 = vcmask 97280
      %v1798 = vsel %vm1797, %v1765, %v997
      %v1799 = vsel %vm1797, %v1766, %v999
      %v1800 = vsel %vm1797, %v1767, %v1001
      %v1801 = vsel %vm1797, %v1768, %v1003
      %v1802 = vsel %vm1797, %v1769, %v1005
      %v1803 = vsel %vm1797, %v1770, %v1007
      %v1804 = vsel %vm1797, %v1771, %v1009
      %v1805 = vsel %vm1797, %v1772, %v1011
      %v1806 = vsel %vm1797, %v1773, %v1013
      %v1807 = vsel %vm1797, %v1774, %v1015
      %v1808 = vsel %vm1797, %v1775, %v1017
      %v1809 = vsel %vm1797, %v1776, %v1019
      %v1810 = vsel %vm1797, %v1777, %v1021
      %v1811 = vsel %vm1797, %v1778, %v1023
      %v1812 = vsel %vm1797, %v1779, %v1025
      %v1813 = vsel %vm1797, %v1780, %v1027
      %v1814 = vsel %vm1797, %v1781, %v1029
      %v1815 = vsel %vm1797, %v1782, %v1031
      %v1816 = vsel %vm1797, %v1783, %v1033
      %v1817 = vsel %vm1797, %v1784, %v1035
      %v1818 = vsel %vm1797, %v1785, %v1037
      %v1819 = vsel %vm1797, %v1786, %v1039
      %v1820 = vsel %vm1797, %v1787, %v1041
      %v1821 = vsel %vm1797, %v1788, %v1043
      %v1822 = vsel %vm1797, %v1789, %v1045
      %v1823 = vsel %vm1797, %v1790, %v1047
      %v1824 = vsel %vm1797, %v1791, %v1049
      %v1825 = vsel %vm1797, %v1792, %v1051
      %v1826 = vsel %vm1797, %v1793, %v1053
      %v1827 = vsel %vm1797, %v1794, %v1055
      %v1828 = vsel %vm1797, %v1795, %v1057
      %v1829 = vsel %vm1797, %v1796, %v1059
      %vm1830 = vcmask 130048
      %v1831 = vsel %vm1830, %v1798, %v1125
      %v1832 = vsel %vm1830, %v1799, %v1127
      %v1833 = vsel %vm1830, %v1800, %v1129
      %v1834 = vsel %vm1830, %v1801, %v1131
      %v1835 = vsel %vm1830, %v1802, %v1133
      %v1836 = vsel %vm1830, %v1803, %v1135
      %v1837 = vsel %vm1830, %v1804, %v1137
      %v1838 = vsel %vm1830, %v1805, %v1139
      %v1839 = vsel %vm1830, %v1806, %v1141
      %v1840 = vsel %vm1830, %v1807, %v1143
      %v1841 = vsel %vm1830, %v1808, %v1145
      %v1842 = vsel %vm1830, %v1809, %v1147
      %v1843 = vsel %vm1830, %v1810, %v1149
      %v1844 = vsel %vm1830, %v1811, %v1151
      %v1845 = vsel %vm1830, %v1812, %v1153
      %v1846 = vsel %vm1830, %v1813, %v1155
      %v1847 = vsel %vm1830, %v1814, %v1157
      %v1848 = vsel %vm1830, %v1815, %v1159
      %v1849 = vsel %vm1830, %v1816, %v1161
      %v1850 = vsel %vm1830, %v1817, %v1163
      %v1851 = vsel %vm1830, %v1818, %v1165
      %v1852 = vsel %vm1830, %v1819, %v1167
      %v1853 = vsel %vm1830, %v1820, %v1169
      %v1854 = vsel %vm1830, %v1821, %v1171
      %v1855 = vsel %vm1830, %v1822, %v1173
      %v1856 = vsel %vm1830, %v1823, %v1175
      %v1857 = vsel %vm1830, %v1824, %v1177
      %v1858 = vsel %vm1830, %v1825, %v1179
      %v1859 = vsel %vm1830, %v1826, %v1181
      %v1860 = vsel %vm1830, %v1827, %v1183
      %v1861 = vsel %vm1830, %v1828, %v1185
      %v1862 = vsel %vm1830, %v1829, %v1187
      %vm1863 = vcmask 162816
      %v1864 = vsel %vm1863, %v1831, %v1253
      %v1865 = vsel %vm1863, %v1832, %v1255
      %v1866 = vsel %vm1863, %v1833, %v1257
      %v1867 = vsel %vm1863, %v1834, %v1259
      %v1868 = vsel %vm1863, %v1835, %v1261
      %v1869 = vsel %vm1863, %v1836, %v1263
      %v1870 = vsel %vm1863, %v1837, %v1265
      %v1871 = vsel %vm1863, %v1838, %v1267
      %v1872 = vsel %vm1863, %v1839, %v1269
      %v1873 = vsel %vm1863, %v1840, %v1271
      %v1874 = vsel %vm1863, %v1841, %v1273
      %v1875 = vsel %vm1863, %v1842, %v1275
      %v1876 = vsel %vm1863, %v1843, %v1277
      %v1877 = vsel %vm1863, %v1844, %v1279
      %v1878 = vsel %vm1863, %v1845, %v1281
      %v1879 = vsel %vm1863, %v1846, %v1283
      %v1880 = vsel %vm1863, %v1847, %v1285
      %v1881 = vsel %vm1863, %v1848, %v1287
      %v1882 = vsel %vm1863, %v1849, %v1289
      %v1883 = vsel %vm1863, %v1850, %v1291
      %v1884 = vsel %vm1863, %v1851, %v1293
      %v1885 = vsel %vm1863, %v1852, %v1295
      %v1886 = vsel %vm1863, %v1853, %v1297
      %v1887 = vsel %vm1863, %v1854, %v1299
      %v1888 = vsel %vm1863, %v1855, %v1301
      %v1889 = vsel %vm1863, %v1856, %v1303
      %v1890 = vsel %vm1863, %v1857, %v1305
      %v1891 = vsel %vm1863, %v1858, %v1307
      %v1892 = vsel %vm1863, %v1859, %v1309
      %v1893 = vsel %vm1863, %v1860, %v1311
      %v1894 = vsel %vm1863, %v1861, %v1313
      %v1895 = vsel %vm1863, %v1862, %v1315
      %vm1896 = vcmask 195584
      %v1897 = vsel %vm1896, %v1864, %v1381
      %v1898 = vsel %vm1896, %v1865, %v1383
      %v1899 = vsel %vm1896, %v1866, %v1385
      %v1900 = vsel %vm1896, %v1867, %v1387
      %v1901 = vsel %vm1896, %v1868, %v1389
      %v1902 = vsel %vm1896, %v1869, %v1391
      %v1903 = vsel %vm1896, %v1870, %v1393
      %v1904 = vsel %vm1896, %v1871, %v1395
      %v1905 = vsel %vm1896, %v1872, %v1397
      %v1906 = vsel %vm1896, %v1873, %v1399
      %v1907 = vsel %vm1896, %v1874, %v1401
      %v1908 = vsel %vm1896, %v1875, %v1403
      %v1909 = vsel %vm1896, %v1876, %v1405
      %v1910 = vsel %vm1896, %v1877, %v1407
      %v1911 = vsel %vm1896, %v1878, %v1409
      %v1912 = vsel %vm1896, %v1879, %v1411
      %v1913 = vsel %vm1896, %v1880, %v1413
      %v1914 = vsel %vm1896, %v1881, %v1415
      %v1915 = vsel %vm1896, %v1882, %v1417
      %v1916 = vsel %vm1896, %v1883, %v1419
      %v1917 = vsel %vm1896, %v1884, %v1421
      %v1918 = vsel %vm1896, %v1885, %v1423
      %v1919 = vsel %vm1896, %v1886, %v1425
      %v1920 = vsel %vm1896, %v1887, %v1427
      %v1921 = vsel %vm1896, %v1888, %v1429
      %v1922 = vsel %vm1896, %v1889, %v1431
      %v1923 = vsel %vm1896, %v1890, %v1433
      %v1924 = vsel %vm1896, %v1891, %v1435
      %v1925 = vsel %vm1896, %v1892, %v1437
      %v1926 = vsel %vm1896, %v1893, %v1439
      %v1927 = vsel %vm1896, %v1894, %v1441
      %v1928 = vsel %vm1896, %v1895, %v1443
      %vm1929 = vcmask 228352
      %v1930 = vsel %vm1929, %v1897, %v1509
      %v1931 = vsel %vm1929, %v1898, %v1511
      %v1932 = vsel %vm1929, %v1899, %v1513
      %v1933 = vsel %vm1929, %v1900, %v1515
      %v1934 = vsel %vm1929, %v1901, %v1517
      %v1935 = vsel %vm1929, %v1902, %v1519
      %v1936 = vsel %vm1929, %v1903, %v1521
      %v1937 = vsel %vm1929, %v1904, %v1523
      %v1938 = vsel %vm1929, %v1905, %v1525
      %v1939 = vsel %vm1929, %v1906, %v1527
      %v1940 = vsel %vm1929, %v1907, %v1529
      %v1941 = vsel %vm1929, %v1908, %v1531
      %v1942 = vsel %vm1929, %v1909, %v1533
      %v1943 = vsel %vm1929, %v1910, %v1535
      %v1944 = vsel %vm1929, %v1911, %v1537
      %v1945 = vsel %vm1929, %v1912, %v1539
      %v1946 = vsel %vm1929, %v1913, %v1541
      %v1947 = vsel %vm1929, %v1914, %v1543
      %v1948 = vsel %vm1929, %v1915, %v1545
      %v1949 = vsel %vm1929, %v1916, %v1547
      %v1950 = vsel %vm1929, %v1917, %v1549
      %v1951 = vsel %vm1929, %v1918, %v1551
      %v1952 = vsel %vm1929, %v1919, %v1553
      %v1953 = vsel %vm1929, %v1920, %v1555
      %v1954 = vsel %vm1929, %v1921, %v1557
      %v1955 = vsel %vm1929, %v1922, %v1559
      %v1956 = vsel %vm1929, %v1923, %v1561
      %v1957 = vsel %vm1929, %v1924, %v1563
      %v1958 = vsel %vm1929, %v1925, %v1565
      %v1959 = vsel %vm1929, %v1926, %v1567
      %v1960 = vsel %vm1929, %v1927, %v1569
      %v1961 = vsel %vm1929, %v1928, %v1571
      %vm1962 = vcmask 261120
      %v1963 = vsel %vm1962, %v1930, %v1637
      %v1964 = vsel %vm1962, %v1931, %v1639
      %v1965 = vsel %vm1962, %v1932, %v1641
      %v1966 = vsel %vm1962, %v1933, %v1643
      %v1967 = vsel %vm1962, %v1934, %v1645
      %v1968 = vsel %vm1962, %v1935, %v1647
      %v1969 = vsel %vm1962, %v1936, %v1649
      %v1970 = vsel %vm1962, %v1937, %v1651
      %v1971 = vsel %vm1962, %v1938, %v1653
      %v1972 = vsel %vm1962, %v1939, %v1655
      %v1973 = vsel %vm1962, %v1940, %v1657
      %v1974 = vsel %vm1962, %v1941, %v1659
      %v1975 = vsel %vm1962, %v1942, %v1661
      %v1976 = vsel %vm1962, %v1943, %v1663
      %v1977 = vsel %vm1962, %v1944, %v1665
      %v1978 = vsel %vm1962, %v1945, %v1667
      %v1979 = vsel %vm1962, %v1946, %v1669
      %v1980 = vsel %vm1962, %v1947, %v1671
      %v1981 = vsel %vm1962, %v1948, %v1673
      %v1982 = vsel %vm1962, %v1949, %v1675
      %v1983 = vsel %vm1962, %v1950, %v1677
      %v1984 = vsel %vm1962, %v1951, %v1679
      %v1985 = vsel %vm1962, %v1952, %v1681
      %v1986 = vsel %vm1962, %v1953, %v1683
      %v1987 = vsel %vm1962, %v1954, %v1685
      %v1988 = vsel %vm1962, %v1955, %v1687
      %v1989 = vsel %vm1962, %v1956, %v1689
      %v1990 = vsel %vm1962, %v1957, %v1691
      %v1991 = vsel %vm1962, %v1958, %v1693
      %v1992 = vsel %vm1962, %v1959, %v1695
      %v1993 = vsel %vm1962, %v1960, %v1697
      %v1994 = vsel %vm1962, %v1961, %v1699
      %v1995 = vld [vmem:[%s3] sm:$0xff]
      %v1996 = vld [vmem:[%s3 + $0x8] sm:$0xff]
      %v1997 = vld [vmem:[%s3 + $0x10] sm:$0xff]
      %v1998 = vld [vmem:[%s3 + $0x18] sm:$0xff]
      %v1999 = vld [vmem:[%s3 + $0x20] sm:$0xf]
      %vm2000 = vcmask 293888
      %v2002 = vsel %vm2000, %v1963, 0
      %v2005 = vsel %vm2000, %v1964, 0
      %v2008 = vsel %vm2000, %v1965, 0
      %v2011 = vsel %vm2000, %v1966, 0
      %v2014 = vsel %vm2000, %v1967, 0
      %v2017 = vsel %vm2000, %v1968, 0
      %v2020 = vsel %vm2000, %v1969, 0
      %v2023 = vsel %vm2000, %v1970, 0
      %v2026 = vsel %vm2000, %v1971, 0
      %v2029 = vsel %vm2000, %v1972, 0
      %v2032 = vsel %vm2000, %v1973, 0
      %v2035 = vsel %vm2000, %v1974, 0
      %v2038 = vsel %vm2000, %v1975, 0
      %v2041 = vsel %vm2000, %v1976, 0
      %v2044 = vsel %vm2000, %v1977, 0
      %v2047 = vsel %vm2000, %v1978, 0
      %v2050 = vsel %vm2000, %v1979, 0
      %v2053 = vsel %vm2000, %v1980, 0
      %v2056 = vsel %vm2000, %v1981, 0
      %v2059 = vsel %vm2000, %v1982, 0
      %v2062 = vsel %vm2000, %v1983, 0
      %v2065 = vsel %vm2000, %v1984, 0
      %v2068 = vsel %vm2000, %v1985, 0
      %v2071 = vsel %vm2000, %v1986, 0
      %v2074 = vsel %vm2000, %v1987, 0
      %v2077 = vsel %vm2000, %v1988, 0
      %v2080 = vsel %vm2000, %v1989, 0
      %v2083 = vsel %vm2000, %v1990, 0
      %v2086 = vsel %vm2000, %v1991, 0
      %v2089 = vsel %vm2000, %v1992, 0
      %v2092 = vsel %vm2000, %v1993, 0
      %v2095 = vsel %vm2000, %v1994, 0
      %vm2097 = vcmask 1043456
      %v2099 = vsel %vm2097, %v1999, 0
      %2101 = vmatprep.subr.mxu0 0.0
      %2102 = vmatpush1.msra.mxu0 %v1995
      %2103 = vmatprep.subr.mxu0 0.0
      %2104 = vmatpush1.msra.mxu0 %v1996
      %2105 = vmatprep.subr.mxu0 0.0
      %2106 = vmatpush1.msra.mxu0 %v1997
      %2107 = vmatprep.subr.mxu0 0.0
      %2108 = vmatpush1.msra.mxu0 %v1998
      %2109 = vmatprep.subr.mxu0 0.0
      %2110 = vmatpush1.msra.mxu0 %v2099
      %2111 = vmatprep.subr.mxu0 0.0
      %2112 = vmatpush1.msra.mxu0 0.0
      %2113 = vmatprep.subr.mxu0 0.0
      %2114 = vmatpush1.msra.mxu0 0.0
      %2115 = vmatprep.subr.mxu0 0.0
      %2116 = vmatpush1.msra.mxu0 0.0
      %2117 = vmatprep.subr.mxu0 0.0
      %2118 = vmatpush1.msra.mxu0 0.0
      %2119 = vmatprep.subr.mxu0 0.0
      %2120 = vmatpush1.msra.mxu0 0.0
      %2121 = vmatprep.subr.mxu0 0.0
      %2122 = vmatpush1.msra.mxu0 0.0
      %2123 = vmatprep.subr.mxu0 0.0
      %2124 = vmatpush1.msra.mxu0 0.0
      %2125 = vmatprep.subr.mxu0 0.0
      %2126 = vmatpush1.msra.mxu0 0.0
      %2127 = vmatprep.subr.mxu0 0.0
      %2128 = vmatpush1.msra.mxu0 0.0
      %2129 = vmatprep.subr.mxu0 0.0
      %2130 = vmatpush1.msra.mxu0 0.0
      %2131 = vmatprep.subr.mxu0 0.0
      %2132 = vmatpush1.msra.mxu0 0.0
      %2133 = vmatprep.subr.mxu0 0.0
      %2134 = vmatpush1.msra.mxu0 0.0
      %2135 = vmatprep.subr.mxu0 0.0
      %2136 = vmatpush1.msra.mxu0 0.0
      %2137 = vmatprep.subr.mxu0 0.0
      %2138 = vmatpush1.msra.mxu0 0.0
      %2139 = vmatprep.subr.mxu0 0.0
      %2140 = vmatpush1.msra.mxu0 0.0
      %2141 = vmatprep.subr.mxu0 0.0
      %2142 = vmatpush1.msra.mxu0 0.0
      %2143 = vmatprep.subr.mxu0 0.0
      %2144 = vmatpush1.msra.mxu0 0.0
      %2145 = vmatprep.subr.mxu0 0.0
      %2146 = vmatpush1.msra.mxu0 0.0
      %2147 = vmatprep.subr.mxu0 0.0
      %2148 = vmatpush1.msra.mxu0 0.0
      %2149 = vmatprep.subr.mxu0 0.0
      %2150 = vmatpush1.msra.mxu0 0.0
      %2151 = vmatprep.subr.mxu0 0.0
      %2152 = vmatpush1.msra.mxu0 0.0
      %2153 = vmatprep.subr.mxu0 0.0
      %2154 = vmatpush1.msra.mxu0 0.0
      %2155 = vmatprep.subr.mxu0 0.0
      %2156 = vmatpush1.msra.mxu0 0.0
      %2157 = vmatprep.subr.mxu0 0.0
      %2158 = vmatpush1.msra.mxu0 0.0
      %2159 = vmatprep.subr.mxu0 0.0
      %2160 = vmatpush1.msra.mxu0 0.0
      %2161 = vmatprep.subr.mxu0 0.0
      %2162 = vmatpush1.msra.mxu0 0.0
      %2163 = vmatprep.subr.mxu0 0.0
      %2164 = vmatpush1.msra.mxu0 0.0
      %2165 = vmatprep.mubr.f32.mxu0 0.0
      %2166 = vmatmul.mubr.f32.gmra.mrb[0].mxu0 %v2002
      %v2167 = vpop.f32.mrb[0].mxu0
      %v2168 = vadd.f32 0.0, %v2167
      %v2169 = vpop.f32.mrb[0].mxu0
      %2170 = vmatprep.mubr.f32.mxu0 0.0
      %2171 = vmatmul.mubr.f32.gmra.mrb[0].mxu0 %v2005
      %v2172 = vpop.f32.mrb[0].mxu0
      %v2173 = vadd.f32 0.0, %v2172
      %v2174 = vpop.f32.mrb[0].mxu0
      %2175 = vmatprep.mubr.f32.mxu0 0.0
      %2176 = vmatmul.mubr.f32.gmra.mrb[0].mxu0 %v2008
      %v2177 = vpop.f32.mrb[0].mxu0
      %v2178 = vadd.f32 0.0, %v2177
      %v2179 = vpop.f32.mrb[0].mxu0
      %2180 = vmatprep.mubr.f32.mxu0 0.0
      %2181 = vmatmul.mubr.f32.gmra.mrb[0].mxu0 %v2011
      %v2182 = vpop.f32.mrb[0].mxu0
      %v2183 = vadd.f32 0.0, %v2182
      %v2184 = vpop.f32.mrb[0].mxu0
      %2185 = vmatprep.mubr.f32.mxu0 0.0
      %2186 = vmatmul.mubr.f32.gmra.mrb[0].mxu0 %v2014
      %v2187 = vpop.f32.mrb[0].mxu0
      %v2188 = vadd.f32 0.0, %v2187
      %v2189 = vpop.f32.mrb[0].mxu0
      %2190 = vmatprep.mubr.f32.mxu0 0.0
      %2191 = vmatmul.mubr.f32.gmra.mrb[0].mxu0 %v2017
      %v2192 = vpop.f32.mrb[0].mxu0
      %v2193 = vadd.f32 0.0, %v2192
      %v2194 = vpop.f32.mrb[0].mxu0
      %2195 = vmatprep.mubr.f32.mxu0 0.0
      %2196 = vmatmul.mubr.f32.gmra.mrb[0].mxu0 %v2020
      %v2197 = vpop.f32.mrb[0].mxu0
      %v2198 = vadd.f32 0.0, %v2197
      %v2199 = vpop.f32.mrb[0].mxu0
      %2200 = vmatprep.mubr.f32.mxu0 0.0
      %2201 = vmatmul.mubr.f32.gmra.mrb[0].mxu0 %v2023
      %v2202 = vpop.f32.mrb[0].mxu0
      %v2203 = vadd.f32 0.0, %v2202
      %v2204 = vpop.f32.mrb[0].mxu0
      %2205 = vmatprep.mubr.f32.mxu0 0.0
      %2206 = vmatmul.mubr.f32.gmra.mrb[0].mxu0 %v2026
      %v2207 = vpop.f32.mrb[0].mxu0
      %v2208 = vadd.f32 0.0, %v2207
      %v2209 = vpop.f32.mrb[0].mxu0
      %2210 = vmatprep.mubr.f32.mxu0 0.0
      %2211 = vmatmul.mubr.f32.gmra.mrb[0].mxu0 %v2029
      %v2212 = vpop.f32.mrb[0].mxu0
      %v2213 = vadd.f32 0.0, %v2212
      %v2214 = vpop.f32.mrb[0].mxu0
      %2215 = vmatprep.mubr.f32.mxu0 0.0
      %2216 = vmatmul.mubr.f32.gmra.mrb[0].mxu0 %v2032
      %v2217 = vpop.f32.mrb[0].mxu0
      %v2218 = vadd.f32 0.0, %v2217
      %v2219 = vpop.f32.mrb[0].mxu0
      %2220 = vmatprep.mubr.f32.mxu0 0.0
      %2221 = vmatmul.mubr.f32.gmra.mrb[0].mxu0 %v2035
      %v2222 = vpop.f32.mrb[0].mxu0
      %v2223 = vadd.f32 0.0, %v2222
      %v2224 = vpop.f32.mrb[0].mxu0
      %2225 = vmatprep.mubr.f32.mxu0 0.0
      %2226 = vmatmul.mubr.f32.gmra.mrb[0].mxu0 %v2038
      %v2227 = vpop.f32.mrb[0].mxu0
      %v2228 = vadd.f32 0.0, %v2227
      %v2229 = vpop.f32.mrb[0].mxu0
      %2230 = vmatprep.mubr.f32.mxu0 0.0
      %2231 = vmatmul.mubr.f32.gmra.mrb[0].mxu0 %v2041
      %v2232 = vpop.f32.mrb[0].mxu0
      %v2233 = vadd.f32 0.0, %v2232
      %v2234 = vpop.f32.mrb[0].mxu0
      %2235 = vmatprep.mubr.f32.mxu0 0.0
      %2236 = vmatmul.mubr.f32.gmra.mrb[0].mxu0 %v2044
      %v2237 = vpop.f32.mrb[0].mxu0
      %v2238 = vadd.f32 0.0, %v2237
      %v2239 = vpop.f32.mrb[0].mxu0
      %2240 = vmatprep.mubr.f32.mxu0 0.0
      %2241 = vmatmul.mubr.f32.gmra.mrb[0].mxu0 %v2047
      %v2242 = vpop.f32.mrb[0].mxu0
      %v2243 = vadd.f32 0.0, %v2242
      %v2244 = vpop.f32.mrb[0].mxu0
      %2245 = vmatprep.mubr.f32.mxu0 0.0
      %2246 = vmatmul.mubr.f32.gmra.mrb[0].mxu0 %v2050
      %v2247 = vpop.f32.mrb[0].mxu0
      %v2248 = vadd.f32 0.0, %v2247
      %v2249 = vpop.f32.mrb[0].mxu0
      %2250 = vmatprep.mubr.f32.mxu0 0.0
      %2251 = vmatmul.mubr.f32.gmra.mrb[0].mxu0 %v2053
      %v2252 = vpop.f32.mrb[0].mxu0
      %v2253 = vadd.f32 0.0, %v2252
      %v2254 = vpop.f32.mrb[0].mxu0
      %2255 = vmatprep.mubr.f32.mxu0 0.0
      %2256 = vmatmul.mubr.f32.gmra.mrb[0].mxu0 %v2056
      %v2257 = vpop.f32.mrb[0].mxu0
      %v2258 = vadd.f32 0.0, %v2257
      %v2259 = vpop.f32.mrb[0].mxu0
      %2260 = vmatprep.mubr.f32.mxu0 0.0
      %2261 = vmatmul.mubr.f32.gmra.mrb[0].mxu0 %v2059
      %v2262 = vpop.f32.mrb[0].mxu0
      %v2263 = vadd.f32 0.0, %v2262
      %v2264 = vpop.f32.mrb[0].mxu0
      %2265 = vmatprep.mubr.f32.mxu0 0.0
      %2266 = vmatmul.mubr.f32.gmra.mrb[0].mxu0 %v2062
      %v2267 = vpop.f32.mrb[0].mxu0
      %v2268 = vadd.f32 0.0, %v2267
      %v2269 = vpop.f32.mrb[0].mxu0
      %2270 = vmatprep.mubr.f32.mxu0 0.0
      %2271 = vmatmul.mubr.f32.gmra.mrb[0].mxu0 %v2065
      %v2272 = vpop.f32.mrb[0].mxu0
      %v2273 = vadd.f32 0.0, %v2272
      %v2274 = vpop.f32.mrb[0].mxu0
      %2275 = vmatprep.mubr.f32.mxu0 0.0
      %2276 = vmatmul.mubr.f32.gmra.mrb[0].mxu0 %v2068
      %v2277 = vpop.f32.mrb[0].mxu0
      %v2278 = vadd.f32 0.0, %v2277
      %v2279 = vpop.f32.mrb[0].mxu0
      %2280 = vmatprep.mubr.f32.mxu0 0.0
      %2281 = vmatmul.mubr.f32.gmra.mrb[0].mxu0 %v2071
      %v2282 = vpop.f32.mrb[0].mxu0
      %v2283 = vadd.f32 0.0, %v2282
      %v2284 = vpop.f32.mrb[0].mxu0
      %2285 = vmatprep.mubr.f32.mxu0 0.0
      %2286 = vmatmul.mubr.f32.gmra.mrb[0].mxu0 %v2074
      %v2287 = vpop.f32.mrb[0].mxu0
      %v2288 = vadd.f32 0.0, %v2287
      %v2289 = vpop.f32.mrb[0].mxu0
      %2290 = vmatprep.mubr.f32.mxu0 0.0
      %2291 = vmatmul.mubr.f32.gmra.mrb[0].mxu0 %v2077
      %v2292 = vpop.f32.mrb[0].mxu0
      %v2293 = vadd.f32 0.0, %v2292
      %v2294 = vpop.f32.mrb[0].mxu0
      %2295 = vmatprep.mubr.f32.mxu0 0.0
      %2296 = vmatmul.mubr.f32.gmra.mrb[0].mxu0 %v2080
      %v2297 = vpop.f32.mrb[0].mxu0
      %v2298 = vadd.f32 0.0, %v2297
      %v2299 = vpop.f32.mrb[0].mxu0
      %2300 = vmatprep.mubr.f32.mxu0 0.0
      %2301 = vmatmul.mubr.f32.gmra.mrb[0].mxu0 %v2083
      %v2302 = vpop.f32.mrb[0].mxu0
      %v2303 = vadd.f32 0.0, %v2302
      %v2304 = vpop.f32.mrb[0].mxu0
      %2305 = vmatprep.mubr.f32.mxu0 0.0
      %2306 = vmatmul.mubr.f32.gmra.mrb[0].mxu0 %v2086
      %v2307 = vpop.f32.mrb[0].mxu0
      %v2308 = vadd.f32 0.0, %v2307
      %v2309 = vpop.f32.mrb[0].mxu0
      %2310 = vmatprep.mubr.f32.mxu0 0.0
      %2311 = vmatmul.mubr.f32.gmra.mrb[0].mxu0 %v2089
      %v2312 = vpop.f32.mrb[0].mxu0
      %v2313 = vadd.f32 0.0, %v2312
      %v2314 = vpop.f32.mrb[0].mxu0
      %2315 = vmatprep.mubr.f32.mxu0 0.0
      %2316 = vmatmul.mubr.f32.gmra.mrb[0].mxu0 %v2092
      %v2317 = vpop.f32.mrb[0].mxu0
      %v2318 = vadd.f32 0.0, %v2317
      %v2319 = vpop.f32.mrb[0].mxu0
      %2320 = vmatprep.mubr.f32.mxu0 0.0
      %2321 = vmatmul.mubr.f32.gmra.mrb[0].mxu0 %v2095
      %v2322 = vpop.f32.mrb[0].mxu0
      %v2323 = vadd.f32 0.0, %v2322
      %v2324 = vpop.f32.mrb[0].mxu0
      %2325 = vdwg.mxu0
      %2326 = vst.msk [vmem:[%s197] sm:$0xff] %vm1764, %v2168
      %2327 = vst.msk [vmem:[%s197 + $0x8] sm:$0xff] %vm1764, %v2173
      %2328 = vst.msk [vmem:[%s197 + $0x10] sm:$0xff] %vm1764, %v2178
      %2329 = vst.msk [vmem:[%s197 + $0x18] sm:$0xff] %vm1764, %v2183
      %2330 = vst.msk [vmem:[%s197 + $0x20] sm:$0xff] %vm1764, %v2188
      %2331 = vst.msk [vmem:[%s197 + $0x28] sm:$0xff] %vm1764, %v2193
      %2332 = vst.msk [vmem:[%s197 + $0x30] sm:$0xff] %vm1764, %v2198
      %2333 = vst.msk [vmem:[%s197 + $0x38] sm:$0xff] %vm1764, %v2203
      %2334 = vst.msk [vmem:[%s197 + $0x40] sm:$0xff] %vm1764, %v2208
      %2335 = vst.msk [vmem:[%s197 + $0x48] sm:$0xff] %vm1764, %v2213
      %2336 = vst.msk [vmem:[%s197 + $0x50] sm:$0xff] %vm1764, %v2218
      %2337 = vst.msk [vmem:[%s197 + $0x58] sm:$0xff] %vm1764, %v2223
      %2338 = vst.msk [vmem:[%s197 + $0x60] sm:$0xff] %vm1764, %v2228
      %2339 = vst.msk [vmem:[%s197 + $0x68] sm:$0xff] %vm1764, %v2233
      %2340 = vst.msk [vmem:[%s197 + $0x70] sm:$0xff] %vm1764, %v2238
      %2341 = vst.msk [vmem:[%s197 + $0x78] sm:$0xff] %vm1764, %v2243
      %2342 = vst.msk [vmem:[%s197 + $0x80] sm:$0xff] %vm1764, %v2248
      %2343 = vst.msk [vmem:[%s197 + $0x88] sm:$0xff] %vm1764, %v2253
      %2344 = vst.msk [vmem:[%s197 + $0x90] sm:$0xff] %vm1764, %v2258
      %2345 = vst.msk [vmem:[%s197 + $0x98] sm:$0xff] %vm1764, %v2263
      %2346 = vst.msk [vmem:[%s197 + $0xa0] sm:$0xff] %vm1764, %v2268
      %2347 = vst.msk [vmem:[%s197 + $0xa8] sm:$0xff] %vm1764, %v2273
      %2348 = vst.msk [vmem:[%s197 + $0xb0] sm:$0xff] %vm1764, %v2278
      %2349 = vst.msk [vmem:[%s197 + $0xb8] sm:$0xff] %vm1764, %v2283
      %2350 = vst.msk [vmem:[%s197 + $0xc0] sm:$0xff] %vm1764, %v2288
      %2351 = vst.msk [vmem:[%s197 + $0xc8] sm:$0xff] %vm1764, %v2293
      %2352 = vst.msk [vmem:[%s197 + $0xd0] sm:$0xff] %vm1764, %v2298
      %2353 = vst.msk [vmem:[%s197 + $0xd8] sm:$0xff] %vm1764, %v2303
      %2354 = vst.msk [vmem:[%s197 + $0xe0] sm:$0xff] %vm1764, %v2308
      %2355 = vst.msk [vmem:[%s197 + $0xe8] sm:$0xff] %vm1764, %v2313
      %2356 = vst.msk [vmem:[%s197 + $0xf0] sm:$0xff] %vm1764, %v2318
      %2357 = vst.msk [vmem:[%s197 + $0xf8] sm:$0xff] %vm1764, %v2323
      %p2358 = scmp.lt.s32.totalorder %s15, 1
      %s2359 = scalar_select %p2358, %s15, 1
      %s2360 = smul.addr %s2359, 32
      %s2361 = smul.addr %s2360, 8
      %s2362 = scalar_lea.vmem %s4, %s2361
      // Predicated region
      $region37: #{single_layer_forward.1} parent=35 // pred_check
        %p2363 = pneg %p122
      $region38: #{single_layer_forward.1} parent=35 // pred_check_branch
        %2365 = sbr.rel (%p2363) target = $region40
      $region39: #{single_layer_forward.1} parent=35 // pred_region
        _
      $region40: #{single_layer_forward.1} parent=35 // pred_fallthru
        _
    $region36: #{single_layer_forward.1} parent=5 // pred_fallthru
      _
    %p2366 = scmp.le.s32.totalorder 2, %s10
    // Predicated region
    $region41: #{single_layer_forward.1} parent=5 // pred_check
      %p2367 = pneg %p2366
    $region42: #{single_layer_forward.1} parent=5 // pred_check_branch
      %2369 = sbr.rel (%p2367) target = $region44
    $region43: #{single_layer_forward.1} parent=5 // pred_region
      %s2370 = ssub.s32 %s10, 2
      // Predicated region
      $region45: #{single_layer_forward.1} parent=43 // pred_check
        %p2371 = pneg %p128
      $region46: #{single_layer_forward.1} parent=43 // pred_check_branch
        %2373 = sbr.rel (%p2371) target = $region48
      $region47: #{single_layer_forward.1} parent=43 // pred_region
        %p2374 = scmp.lt.s32.totalorder %s16, 1
        %s2375 = scalar_select %p2374, %s16, 1
        %s2376 = smul.addr %s2375, 32
        %s2377 = smul.addr %s2376, 8
        %s2378 = scalar_lea.vmem %s4, %s2377
      $region48: #{single_layer_forward.1} parent=43 // pred_fallthru
        _
    $region44: #{single_layer_forward.1} parent=5 // pred_fallthru
      _
  $region6: #{single_layer_forward.1} parent=0 // loop_footer
    %s14 = sadd.s32 1, %s10
  $region7: #{single_layer_forward.1} parent=0 // loop_footer_branch
    %9 = sbr.rel target = $region3
  $region8: #{single_layer_forward.1} parent=0 // loop_exit
    _

</llo_original>
